<compile_context>
chip_gen: v7x
topology: tpu7x:2x2x1
jax: 0.10.0
libtpu: 0.0.40
codegen_flags: <defaults>
</compile_context>

<pallas_src>
import math
import jax
import jax.numpy as jnp
from jax.experimental import pallas as pl

# ---- problem sizes (small, consistent with the module) ----
D_MODEL = 32      # d_model
NHEAD   = 4
HEAD_D  = D_MODEL // NHEAD
L_TGT   = 8       # target sequence length
L_MEM   = 16      # memory sequence length
BATCH   = 2
EPS     = 1e-5
NEG_INF = -1e30

# dot_general dimension numbers for A @ B.T (contract last dim of both); avoids an
# in-kernel transpose (same pattern as the reference TPU flash-attention kernel).
_TRANS_B = (((1,), (1,)), ((), ()))


def _layer_norm(x, gamma, beta):
    # gamma/beta shaped (1, D); PyTorch LayerNorm: biased variance, eps=1e-5
    mu = jnp.mean(x, axis=-1, keepdims=True)
    var = jnp.mean((x - mu) ** 2, axis=-1, keepdims=True)
    return (x - mu) * jax.lax.rsqrt(var + EPS) * gamma + beta


def _attn_core(q, k, v, w_out, b_out, head_mask, seg_ones, batch_bias):
    """All-head, all-batch multihead attention on packed 2-D operands.

    q          : (B*Lq, D)  (already scaled by 1/sqrt(HEAD_D) through the weights)
    k, v       : (B*Lk, D)
    head_mask  : (NHEAD*B*Lk, D)            1 where packed-key head == feature head
    seg_ones   : (NHEAD*B*Lk, NHEAD*B*Lk)   block-diag ones over Lk-long segments
    batch_bias : (B*Lq, NHEAD*B*Lk)         0 for same-batch key, -1e30 otherwise
    Packed key/value column index is  h*(B*Lk) + b*Lk + j.
    """
    # Head-block-diagonal K/V: one sublane concat + one mask multiply each.
    k_rows = jnp.concatenate([k] * NHEAD, axis=0) * head_mask   # (NH*B*Lk, D)
    v_rows = jnp.concatenate([v] * NHEAD, axis=0) * head_mask   # (NH*B*Lk, D)

    # All heads x all batches scores in a single lane-dense matmul.
    s = jax.lax.dot_general(q, k_rows, _TRANS_B,
                            preferred_element_type=jnp.float32)  # (B*Lq, NH*B*Lk)
    s = s + batch_bias                                 # mask cross-batch keys
    s = s - jnp.max(s, axis=-1, keepdims=True)         # per-row shift (valid per segment)
    p = jnp.exp(s)

    # Per-(head, batch) segment softmax denominators via one matmul with block-diag ones.
    seg = jnp.dot(p, seg_ones, preferred_element_type=jnp.float32)
    p = p * pl.reciprocal(jnp.maximum(seg, 1e-20), approx=True)

    o = jnp.dot(p, v_rows, preferred_element_type=jnp.float32)   # (B*Lq, D)
    return jnp.dot(o, w_out, preferred_element_type=jnp.float32) + b_out


def decoder_layer_kernel(
        tgt_ref, mem_ref, qpos_ref, pos_ref,
        w_sa_qk_ref, b_sa_qk_ref, w_sa_v_ref, b_sa_v_ref, w_sa_o_ref, b_sa_o_ref,
        w_ca_q_ref, b_ca_q_ref, w_ca_k_ref, b_ca_k_ref, w_ca_v_ref, b_ca_v_ref,
        w_ca_ol1_ref, b_ca_ol1_ref,
        n1_g_ref, n1_b_ref, n2_g_ref, n2_b_ref,
        sa_hm_ref, sa_seg_ref, sa_bias_ref,
        ca_hm_ref, ca_seg_ref, ca_bias_ref,
        out_ref):
    tgt = tgt_ref[...]      # (B*L_TGT, D)
    mem = mem_ref[...]      # (B*L_MEM, D)
    qpos = qpos_ref[...]    # (B*L_TGT, D)
    pos = pos_ref[...]      # (B*L_MEM, D)

    # ---- self attention: q = k = tgt + query_pos, v = tgt ----
    qk_in = tgt + qpos
    qk = jnp.dot(qk_in, w_sa_qk_ref[...],
                 preferred_element_type=jnp.float32) + b_sa_qk_ref[...]   # fused [Q|K]
    q = qk[:, :D_MODEL]
    k = qk[:, D_MODEL:]
    v = jnp.dot(tgt, w_sa_v_ref[...],
                preferred_element_type=jnp.float32) + b_sa_v_ref[...]
    sa = _attn_core(q, k, v, w_sa_o_ref[...], b_sa_o_ref[...],
                    sa_hm_ref[...], sa_seg_ref[...], sa_bias_ref[...])
    x = _layer_norm(tgt + sa, n1_g_ref[...], n1_b_ref[...])   # dropout1 == identity (eval)

    # ---- cross attention: q = x + query_pos, k = memory + pos, v = memory ----
    q = jnp.dot(x + qpos, w_ca_q_ref[...],
                preferred_element_type=jnp.float32) + b_ca_q_ref[...]
    k = jnp.dot(mem + pos, w_ca_k_ref[...],
                preferred_element_type=jnp.float32) + b_ca_k_ref[...]
    v = jnp.dot(mem, w_ca_v_ref[...],
                preferred_element_type=jnp.float32) + b_ca_v_ref[...]
    # cross-attn out_proj and linear1 were fused host-side into w_ca_ol1 / b_ca_ol1
    ca = _attn_core(q, k, v, w_ca_ol1_ref[...], b_ca_ol1_ref[...],
                    ca_hm_ref[...], ca_seg_ref[...], ca_bias_ref[...])

    out = _layer_norm(x + ca, n2_g_ref[...], n2_b_ref[...])    # dropout2 == identity (eval)
    out_ref[...] = out.astype(out_ref.dtype)


def _attention_masks(l_q, l_k):
    """Constant masks for the fused (head x batch) attention layout (built host-side)."""
    n_cols = NHEAD * BATCH * l_k
    col = jnp.arange(n_cols)
    # (NHEAD*B*l_k, D): 1 where the packed key's head matches the feature column's head
    head_mask = (col[:, None] // (BATCH * l_k) ==
                 jnp.arange(D_MODEL)[None, :] // HEAD_D).astype(jnp.float32)
    # (n_cols, n_cols): block-diag ones over each (head, batch) segment of length l_k
    seg_ones = (col[:, None] // l_k == col[None, :] // l_k).astype(jnp.float32)
    # (B*l_q, n_cols): 0 for same-batch query/key pairs, -1e30 otherwise
    row = jnp.arange(BATCH * l_q)
    same_batch = (row[:, None] // l_q) == ((col[None, :] % (BATCH * l_k)) // l_k)
    batch_bias = jnp.where(same_batch, 0.0, NEG_INF).astype(jnp.float32)
    return head_mask, seg_ones, batch_bias


def _prepare_kernel_inputs(params):
    """Host-side weight prep: transpose to x@W orientation, split in_proj, fold the
    1/sqrt(head_dim) scale into Q, fuse self-attn [Q|K], fuse cross-attn out_proj∘linear1."""
    D = D_MODEL
    scale = 1.0 / math.sqrt(HEAD_D)

    sa_w, sa_b = params["sa_in_w"], params["sa_in_b"]
    wq = sa_w[0:D].T * scale
    wk = sa_w[D:2 * D].T
    wv = sa_w[2 * D:3 * D].T
    bq = sa_b[:, 0:D] * scale
    bk = sa_b[:, D:2 * D]
    bv = sa_b[:, 2 * D:3 * D]
    w_sa_qk = jnp.concatenate([wq, wk], axis=1)     # (D, 2D)
    b_sa_qk = jnp.concatenate([bq, bk], axis=1)     # (1, 2D)
    w_sa_o = params["sa_out_w"].T
    b_sa_o = params["sa_out_b"]

    ca_w, ca_b = params["ca_in_w"], params["ca_in_b"]
    w_ca_q = ca_w[0:D].T * scale
    b_ca_q = ca_b[:, 0:D] * scale
    w_ca_k = ca_w[D:2 * D].T
    b_ca_k = ca_b[:, D:2 * D]
    w_ca_v = ca_w[2 * D:3 * D].T
    b_ca_v = ca_b[:, 2 * D:3 * D]

    # (attn out_proj) followed directly by linear1 == one linear map
    w_ca_o = params["ca_out_w"].T
    b_ca_o = params["ca_out_b"]
    w_l1 = params["lin1_w"].T
    b_l1 = params["lin1_b"]
    w_ca_ol1 = w_ca_o @ w_l1
    b_ca_ol1 = b_ca_o @ w_l1 + b_l1

    return (w_sa_qk, b_sa_qk, wv, bv, w_sa_o, b_sa_o,
            w_ca_q, b_ca_q, w_ca_k, b_ca_k, w_ca_v, b_ca_v, w_ca_ol1, b_ca_ol1,
            params["n1_g"], params["n1_b"], params["n2_g"], params["n2_b"])


def transformer_decoder_layer_thin(tgt, memory, query_pos, pos, params):
    """tgt/query_pos: (B, L_TGT, D); memory/pos: (B, L_MEM, D)."""
    B, Lq, D = tgt.shape
    Lk = memory.shape[1]

    weights = _prepare_kernel_inputs(params)
    sa_masks = _attention_masks(Lq, Lq)     # self-attn keys = tgt
    ca_masks = _attention_masks(Lq, Lk)     # cross-attn keys = memory

    # Single invocation: whole problem (<~150 KB incl. masks) is VMEM resident; no grid,
    # so no per-step pipeline overhead and no double-buffering of the shared weights.
    out2d = pl.pallas_call(
        decoder_layer_kernel,
        out_shape=jax.ShapeDtypeStruct((B * Lq, D), tgt.dtype),
    )(
        tgt.reshape(B * Lq, D), memory.reshape(B * Lk, D),
        query_pos.reshape(B * Lq, D), pos.reshape(B * Lk, D),
        *weights, *sa_masks, *ca_masks,
    )
    return out2d.reshape(B, Lq, D)


# ---- pure-JAX reference (mirrors PyTorch forward_post, eval mode) ----
def _reference(tgt, memory, query_pos, pos, p):
    def mha_ref(q_in, k_in, v_in, in_w, in_b, out_w, out_b):
        D = D_MODEL
        q = q_in @ in_w[0:D].T + in_b[0, 0:D]
        k = k_in @ in_w[D:2 * D].T + in_b[0, D:2 * D]
        v = v_in @ in_w[2 * D:3 * D].T + in_b[0, 2 * D:3 * D]
        B, Lq, _ = q.shape
        Lk = k.shape[1]
        q = q.reshape(B, Lq, NHEAD, HEAD_D).transpose(0, 2, 1, 3) / math.sqrt(HEAD_D)
        k = k.reshape(B, Lk, NHEAD, HEAD_D).transpose(0, 2, 1, 3)
        v = v.reshape(B, Lk, NHEAD, HEAD_D).transpose(0, 2, 1, 3)
        s = jnp.einsum("bhqd,bhkd->bhqk", q, k)
        a = jax.nn.softmax(s, axis=-1)
        o = jnp.einsum("bhqk,bhkd->bhqd", a, v)
        o = o.transpose(0, 2, 1, 3).reshape(B, Lq, D)
        return o @ out_w.T + out_b[0]

    def ln(x, g, b):
        mu = x.mean(-1, keepdims=True)
        var = ((x - mu) ** 2).mean(-1, keepdims=True)
        return (x - mu) / jnp.sqrt(var + EPS) * g[0] + b[0]

    qk = tgt + query_pos
    tgt2 = mha_ref(qk, qk, tgt, p["sa_in_w"], p["sa_in_b"], p["sa_out_w"], p["sa_out_b"])
    t = ln(tgt + tgt2, p["n1_g"], p["n1_b"])
    tgt2 = mha_ref(t + query_pos, memory + pos, memory,
                   p["ca_in_w"], p["ca_in_b"], p["ca_out_w"], p["ca_out_b"])
    tgt2 = tgt2 @ p["lin1_w"].T + p["lin1_b"][0]
    return ln(t + tgt2, p["n2_g"], p["n2_b"])


if __name__ == "__main__":
    key = jax.random.PRNGKey(0)
    ks = jax.random.split(key, 16)

    tgt = jax.random.normal(ks[0], (BATCH, L_TGT, D_MODEL), jnp.float32)
    memory = jax.random.normal(ks[1], (BATCH, L_MEM, D_MODEL), jnp.float32)
    query_pos = jax.random.normal(ks[2], (BATCH, L_TGT, D_MODEL), jnp.float32)
    pos = jax.random.normal(ks[3], (BATCH, L_MEM, D_MODEL), jnp.float32)

    s = 0.05
    params = {
        "sa_in_w": s * jax.random.normal(ks[4], (3 * D_MODEL, D_MODEL), jnp.float32),
        "sa_in_b": s * jax.random.normal(ks[5], (1, 3 * D_MODEL), jnp.float32),
        "sa_out_w": s * jax.random.normal(ks[6], (D_MODEL, D_MODEL), jnp.float32),
        "sa_out_b": s * jax.random.normal(ks[7], (1, D_MODEL), jnp.float32),
        "ca_in_w": s * jax.random.normal(ks[8], (3 * D_MODEL, D_MODEL), jnp.float32),
        "ca_in_b": s * jax.random.normal(ks[9], (1, 3 * D_MODEL), jnp.float32),
        "ca_out_w": s * jax.random.normal(ks[10], (D_MODEL, D_MODEL), jnp.float32),
        "ca_out_b": s * jax.random.normal(ks[11], (1, D_MODEL), jnp.float32),
        "lin1_w": s * jax.random.normal(ks[12], (D_MODEL, D_MODEL), jnp.float32),
        "lin1_b": s * jax.random.normal(ks[13], (1, D_MODEL), jnp.float32),
        "n1_g": 1.0 + 0.1 * jax.random.normal(ks[14], (1, D_MODEL), jnp.float32),
        "n1_b": jnp.zeros((1, D_MODEL), jnp.float32),
        "n2_g": 1.0 + 0.1 * jax.random.normal(ks[15], (1, D_MODEL), jnp.float32),
        "n2_b": jnp.zeros((1, D_MODEL), jnp.float32),
    }

    out = jax.jit(transformer_decoder_layer_thin)(tgt, memory, query_pos, pos, params)
    out = jax.block_until_ready(out)

    ref = _reference(tgt, memory, query_pos, pos, params)
    assert out.shape == (BATCH, L_TGT, D_MODEL)
    # tolerance loosened slightly (3e-3) for pl.reciprocal(approx=True) in the softmax
    assert jnp.allclose(out, ref, atol=3e-3, rtol=3e-3), (
        float(jnp.max(jnp.abs(out - ref))))

    print("KERNEL_OK")
</pallas_src>

<mosaic_0001>
module attributes {stable_mosaic.version = 11 : i64} {
  func.func @decoder_layer_kernel(%arg0: memref<16x32xf32, #tpu.memory_space<vmem>>, %arg1: memref<32x32xf32, #tpu.memory_space<vmem>>, %arg2: memref<16x32xf32, #tpu.memory_space<vmem>>, %arg3: memref<32x32xf32, #tpu.memory_space<vmem>>, %arg4: memref<32x64xf32, #tpu.memory_space<vmem>>, %arg5: memref<1x64xf32, #tpu.memory_space<vmem>>, %arg6: memref<32x32xf32, #tpu.memory_space<vmem>>, %arg7: memref<1x32xf32, #tpu.memory_space<vmem>>, %arg8: memref<32x32xf32, #tpu.memory_space<vmem>>, %arg9: memref<1x32xf32, #tpu.memory_space<vmem>>, %arg10: memref<32x32xf32, #tpu.memory_space<vmem>>, %arg11: memref<1x32xf32, #tpu.memory_space<vmem>>, %arg12: memref<32x32xf32, #tpu.memory_space<vmem>>, %arg13: memref<1x32xf32, #tpu.memory_space<vmem>>, %arg14: memref<32x32xf32, #tpu.memory_space<vmem>>, %arg15: memref<1x32xf32, #tpu.memory_space<vmem>>, %arg16: memref<32x32xf32, #tpu.memory_space<vmem>>, %arg17: memref<1x32xf32, #tpu.memory_space<vmem>>, %arg18: memref<1x32xf32, #tpu.memory_space<vmem>>, %arg19: memref<1x32xf32, #tpu.memory_space<vmem>>, %arg20: memref<1x32xf32, #tpu.memory_space<vmem>>, %arg21: memref<1x32xf32, #tpu.memory_space<vmem>>, %arg22: memref<64x32xf32, #tpu.memory_space<vmem>>, %arg23: memref<64x64xf32, #tpu.memory_space<vmem>>, %arg24: memref<16x64xf32, #tpu.memory_space<vmem>>, %arg25: memref<128x32xf32, #tpu.memory_space<vmem>>, %arg26: memref<128x128xf32, #tpu.memory_space<vmem>>, %arg27: memref<16x128xf32, #tpu.memory_space<vmem>>, %arg28: memref<16x32xf32, #tpu.memory_space<vmem>>) attributes {dimension_semantics = [], scalar_prefetch = 0 : i64, scratch_operands = 0 : i64, tpu.core_type = #tpu.core_type<tc>} {
    %c0 = arith.constant 0 : index
    %c0_0 = arith.constant 0 : index
    %0 = vector.load %arg0[%c0, %c0_0] : memref<16x32xf32, #tpu.memory_space<vmem>>, vector<16x32xf32>
    %c0_1 = arith.constant 0 : index
    %c0_2 = arith.constant 0 : index
    %1 = vector.load %arg1[%c0_1, %c0_2] : memref<32x32xf32, #tpu.memory_space<vmem>>, vector<32x32xf32>
    %c0_3 = arith.constant 0 : index
    %c0_4 = arith.constant 0 : index
    %2 = vector.load %arg2[%c0_3, %c0_4] : memref<16x32xf32, #tpu.memory_space<vmem>>, vector<16x32xf32>
    %c0_5 = arith.constant 0 : index
    %c0_6 = arith.constant 0 : index
    %3 = vector.load %arg3[%c0_5, %c0_6] : memref<32x32xf32, #tpu.memory_space<vmem>>, vector<32x32xf32>
    %4 = arith.addf %0, %2 : vector<16x32xf32>
    %c0_7 = arith.constant 0 : index
    %c0_8 = arith.constant 0 : index
    %5 = vector.load %arg4[%c0_7, %c0_8] : memref<32x64xf32, #tpu.memory_space<vmem>>, vector<32x64xf32>
    %cst = arith.constant dense<0.000000e+00> : vector<16x64xf32>
    %6 = tpu.matmul %4, %5, %cst {dimension_numbers = #tpu.dot_dimension_numbers<[1], [0], [0], [1], [0, 0, 1, 1], [], []>} : vector<16x32xf32>, vector<32x64xf32>, vector<16x64xf32> -> vector<16x64xf32>
    %c0_9 = arith.constant 0 : index
    %c0_10 = arith.constant 0 : index
    %7 = vector.load %arg5[%c0_9, %c0_10] : memref<1x64xf32, #tpu.memory_space<vmem>>, vector<1x64xf32>
    %8 = vector.broadcast %7 : vector<1x64xf32> to vector<16x64xf32>
    %9 = arith.addf %6, %8 : vector<16x64xf32>
    %10 = vector.extract_strided_slice %9 {offsets = [0, 0], sizes = [16, 32], strides = [1, 1]} : vector<16x64xf32> to vector<16x32xf32>
    %11 = vector.extract_strided_slice %9 {offsets = [0, 32], sizes = [16, 32], strides = [1, 1]} : vector<16x64xf32> to vector<16x32xf32>
    %c0_11 = arith.constant 0 : index
    %c0_12 = arith.constant 0 : index
    %12 = vector.load %arg6[%c0_11, %c0_12] : memref<32x32xf32, #tpu.memory_space<vmem>>, vector<32x32xf32>
    %cst_13 = arith.constant dense<0.000000e+00> : vector<16x32xf32>
    %13 = tpu.matmul %0, %12, %cst_13 {dimension_numbers = #tpu.dot_dimension_numbers<[1], [0], [0], [1], [0, 0, 1, 1], [], []>} : vector<16x32xf32>, vector<32x32xf32>, vector<16x32xf32> -> vector<16x32xf32>
    %c0_14 = arith.constant 0 : index
    %c0_15 = arith.constant 0 : index
    %14 = vector.load %arg7[%c0_14, %c0_15] : memref<1x32xf32, #tpu.memory_space<vmem>>, vector<1x32xf32>
    %15 = vector.broadcast %14 : vector<1x32xf32> to vector<16x32xf32>
    %16 = arith.addf %13, %15 : vector<16x32xf32>
    %c0_16 = arith.constant 0 : index
    %c0_17 = arith.constant 0 : index
    %17 = vector.load %arg8[%c0_16, %c0_17] : memref<32x32xf32, #tpu.memory_space<vmem>>, vector<32x32xf32>
    %c0_18 = arith.constant 0 : index
    %c0_19 = arith.constant 0 : index
    %18 = vector.load %arg9[%c0_18, %c0_19] : memref<1x32xf32, #tpu.memory_space<vmem>>, vector<1x32xf32>
    %c0_20 = arith.constant 0 : index
    %c0_21 = arith.constant 0 : index
    %19 = vector.load %arg22[%c0_20, %c0_21] : memref<64x32xf32, #tpu.memory_space<vmem>>, vector<64x32xf32>
    %c0_22 = arith.constant 0 : index
    %c0_23 = arith.constant 0 : index
    %20 = vector.load %arg23[%c0_22, %c0_23] : memref<64x64xf32, #tpu.memory_space<vmem>>, vector<64x64xf32>
    %c0_24 = arith.constant 0 : index
    %c0_25 = arith.constant 0 : index
    %21 = vector.load %arg24[%c0_24, %c0_25] : memref<16x64xf32, #tpu.memory_space<vmem>>, vector<16x64xf32>
    %22 = tpu.concatenate %11, %11, %11, %11 in 0 : vector<16x32xf32>, vector<16x32xf32>, vector<16x32xf32>, vector<16x32xf32> -> vector<64x32xf32>
    %23 = arith.mulf %22, %19 : vector<64x32xf32>
    %24 = tpu.concatenate %16, %16, %16, %16 in 0 : vector<16x32xf32>, vector<16x32xf32>, vector<16x32xf32>, vector<16x32xf32> -> vector<64x32xf32>
    %25 = arith.mulf %24, %19 : vector<64x32xf32>
    %cst_26 = arith.constant dense<0.000000e+00> : vector<16x64xf32>
    %26 = tpu.matmul %10, %23, %cst_26 {dimension_numbers = #tpu.dot_dimension_numbers<[1], [1], [0], [0], [0, 0, 1, 0], [], []>} : vector<16x32xf32>, vector<64x32xf32>, vector<16x64xf32> -> vector<16x64xf32>
    %27 = arith.addf %26, %21 : vector<16x64xf32>
    %cst_27 = arith.constant dense<0xFF800000> : vector<16xf32>
    %28 = vector.multi_reduction <maximumf>, %27, %cst_27 [1] : vector<16x64xf32> to vector<16xf32>
    %29 = vector.shape_cast %28 : vector<16xf32> to vector<16x1xf32>
    %30 = vector.broadcast %29 : vector<16x1xf32> to vector<16x64xf32>
    %31 = arith.subf %27, %30 : vector<16x64xf32>
    %32 = math.exp %31 : vector<16x64xf32>
    %cst_28 = arith.constant dense<0.000000e+00> : vector<16x64xf32>
    %33 = tpu.matmul %32, %20, %cst_28 {dimension_numbers = #tpu.dot_dimension_numbers<[1], [0], [0], [1], [0, 0, 1, 1], [], []>} : vector<16x64xf32>, vector<64x64xf32>, vector<16x64xf32> -> vector<16x64xf32>
    %cst_29 = arith.constant 9.99999968E-21 : f32
    %34 = vector.broadcast %cst_29 : f32 to vector<16x64xf32>
    %35 = arith.maximumf %33, %34 : vector<16x64xf32>
    %36 = tpu.reciprocal %35 {approx = true} : vector<16x64xf32> -> vector<16x64xf32>
    %37 = arith.mulf %32, %36 : vector<16x64xf32>
    %cst_30 = arith.constant dense<0.000000e+00> : vector<16x32xf32>
    %38 = tpu.matmul %37, %25, %cst_30 {dimension_numbers = #tpu.dot_dimension_numbers<[1], [0], [0], [1], [0, 0, 1, 1], [], []>} : vector<16x64xf32>, vector<64x32xf32>, vector<16x32xf32> -> vector<16x32xf32>
    %cst_31 = arith.constant dense<0.000000e+00> : vector<16x32xf32>
    %39 = tpu.matmul %38, %17, %cst_31 {dimension_numbers = #tpu.dot_dimension_numbers<[1], [0], [0], [1], [0, 0, 1, 1], [], []>} : vector<16x32xf32>, vector<32x32xf32>, vector<16x32xf32> -> vector<16x32xf32>
    %40 = vector.broadcast %18 : vector<1x32xf32> to vector<16x32xf32>
    %41 = arith.addf %39, %40 : vector<16x32xf32>
    %42 = arith.addf %0, %41 : vector<16x32xf32>
    %c0_32 = arith.constant 0 : index
    %c0_33 = arith.constant 0 : index
    %43 = vector.load %arg18[%c0_32, %c0_33] : memref<1x32xf32, #tpu.memory_space<vmem>>, vector<1x32xf32>
    %c0_34 = arith.constant 0 : index
    %c0_35 = arith.constant 0 : index
    %44 = vector.load %arg19[%c0_34, %c0_35] : memref<1x32xf32, #tpu.memory_space<vmem>>, vector<1x32xf32>
    %cst_36 = arith.constant dense<0.000000e+00> : vector<16xf32>
    %45 = vector.multi_reduction <add>, %42, %cst_36 [1] : vector<16x32xf32> to vector<16xf32>
    %46 = vector.shape_cast %45 : vector<16xf32> to vector<16x1xf32>
    %cst_37 = arith.constant 3.200000e+01 : f32
    %47 = vector.broadcast %cst_37 : f32 to vector<16x1xf32>
    %48 = arith.divf %46, %47 : vector<16x1xf32>
    %49 = vector.broadcast %48 : vector<16x1xf32> to vector<16x32xf32>
    %50 = arith.subf %42, %49 : vector<16x32xf32>
    %51 = arith.mulf %50, %50 : vector<16x32xf32>
    %cst_38 = arith.constant dense<0.000000e+00> : vector<16xf32>
    %52 = vector.multi_reduction <add>, %51, %cst_38 [1] : vector<16x32xf32> to vector<16xf32>
    %53 = vector.shape_cast %52 : vector<16xf32> to vector<16x1xf32>
    %cst_39 = arith.constant 3.200000e+01 : f32
    %54 = vector.broadcast %cst_39 : f32 to vector<16x1xf32>
    %55 = arith.divf %53, %54 : vector<16x1xf32>
    %56 = vector.broadcast %48 : vector<16x1xf32> to vector<16x32xf32>
    %57 = arith.subf %42, %56 : vector<16x32xf32>
    %cst_40 = arith.constant 9.99999974E-6 : f32
    %58 = vector.broadcast %cst_40 : f32 to vector<16x1xf32>
    %59 = arith.addf %55, %58 : vector<16x1xf32>
    %60 = math.rsqrt %59 : vector<16x1xf32>
    %61 = vector.broadcast %60 : vector<16x1xf32> to vector<16x32xf32>
    %62 = arith.mulf %57, %61 : vector<16x32xf32>
    %63 = vector.broadcast %43 : vector<1x32xf32> to vector<16x32xf32>
    %64 = arith.mulf %62, %63 : vector<16x32xf32>
    %65 = vector.broadcast %44 : vector<1x32xf32> to vector<16x32xf32>
    %66 = arith.addf %64, %65 : vector<16x32xf32>
    %67 = arith.addf %66, %2 : vector<16x32xf32>
    %c0_41 = arith.constant 0 : index
    %c0_42 = arith.constant 0 : index
    %68 = vector.load %arg10[%c0_41, %c0_42] : memref<32x32xf32, #tpu.memory_space<vmem>>, vector<32x32xf32>
    %cst_43 = arith.constant dense<0.000000e+00> : vector<16x32xf32>
    %69 = tpu.matmul %67, %68, %cst_43 {dimension_numbers = #tpu.dot_dimension_numbers<[1], [0], [0], [1], [0, 0, 1, 1], [], []>} : vector<16x32xf32>, vector<32x32xf32>, vector<16x32xf32> -> vector<16x32xf32>
    %c0_44 = arith.constant 0 : index
    %c0_45 = arith.constant 0 : index
    %70 = vector.load %arg11[%c0_44, %c0_45] : memref<1x32xf32, #tpu.memory_space<vmem>>, vector<1x32xf32>
    %71 = vector.broadcast %70 : vector<1x32xf32> to vector<16x32xf32>
    %72 = arith.addf %69, %71 : vector<16x32xf32>
    %73 = arith.addf %1, %3 : vector<32x32xf32>
    %c0_46 = arith.constant 0 : index
    %c0_47 = arith.constant 0 : index
    %74 = vector.load %arg12[%c0_46, %c0_47] : memref<32x32xf32, #tpu.memory_space<vmem>>, vector<32x32xf32>
    %cst_48 = arith.constant dense<0.000000e+00> : vector<32x32xf32>
    %75 = tpu.matmul %73, %74, %cst_48 {dimension_numbers = #tpu.dot_dimension_numbers<[1], [0], [0], [1], [0, 0, 1, 1], [], []>} : vector<32x32xf32>, vector<32x32xf32>, vector<32x32xf32> -> vector<32x32xf32>
    %c0_49 = arith.constant 0 : index
    %c0_50 = arith.constant 0 : index
    %76 = vector.load %arg13[%c0_49, %c0_50] : memref<1x32xf32, #tpu.memory_space<vmem>>, vector<1x32xf32>
    %77 = vector.broadcast %76 : vector<1x32xf32> to vector<32x32xf32>
    %78 = arith.addf %75, %77 : vector<32x32xf32>
    %c0_51 = arith.constant 0 : index
    %c0_52 = arith.constant 0 : index
    %79 = vector.load %arg14[%c0_51, %c0_52] : memref<32x32xf32, #tpu.memory_space<vmem>>, vector<32x32xf32>
    %cst_53 = arith.constant dense<0.000000e+00> : vector<32x32xf32>
    %80 = tpu.matmul %1, %79, %cst_53 {dimension_numbers = #tpu.dot_dimension_numbers<[1], [0], [0], [1], [0, 0, 1, 1], [], []>} : vector<32x32xf32>, vector<32x32xf32>, vector<32x32xf32> -> vector<32x32xf32>
    %c0_54 = arith.constant 0 : index
    %c0_55 = arith.constant 0 : index
    %81 = vector.load %arg15[%c0_54, %c0_55] : memref<1x32xf32, #tpu.memory_space<vmem>>, vector<1x32xf32>
    %82 = vector.broadcast %81 : vector<1x32xf32> to vector<32x32xf32>
    %83 = arith.addf %80, %82 : vector<32x32xf32>
    %c0_56 = arith.constant 0 : index
    %c0_57 = arith.constant 0 : index
    %84 = vector.load %arg16[%c0_56, %c0_57] : memref<32x32xf32, #tpu.memory_space<vmem>>, vector<32x32xf32>
    %c0_58 = arith.constant 0 : index
    %c0_59 = arith.constant 0 : index
    %85 = vector.load %arg17[%c0_58, %c0_59] : memref<1x32xf32, #tpu.memory_space<vmem>>, vector<1x32xf32>
    %c0_60 = arith.constant 0 : index
    %c0_61 = arith.constant 0 : index
    %86 = vector.load %arg25[%c0_60, %c0_61] : memref<128x32xf32, #tpu.memory_space<vmem>>, vector<128x32xf32>
    %c0_62 = arith.constant 0 : index
    %c0_63 = arith.constant 0 : index
    %87 = vector.load %arg26[%c0_62, %c0_63] : memref<128x128xf32, #tpu.memory_space<vmem>>, vector<128x128xf32>
    %c0_64 = arith.constant 0 : index
    %c0_65 = arith.constant 0 : index
    %88 = vector.load %arg27[%c0_64, %c0_65] : memref<16x128xf32, #tpu.memory_space<vmem>>, vector<16x128xf32>
    %89 = tpu.concatenate %78, %78, %78, %78 in 0 : vector<32x32xf32>, vector<32x32xf32>, vector<32x32xf32>, vector<32x32xf32> -> vector<128x32xf32>
    %90 = arith.mulf %89, %86 : vector<128x32xf32>
    %91 = tpu.concatenate %83, %83, %83, %83 in 0 : vector<32x32xf32>, vector<32x32xf32>, vector<32x32xf32>, vector<32x32xf32> -> vector<128x32xf32>
    %92 = arith.mulf %91, %86 : vector<128x32xf32>
    %cst_66 = arith.constant dense<0.000000e+00> : vector<16x128xf32>
    %93 = tpu.matmul %72, %90, %cst_66 {dimension_numbers = #tpu.dot_dimension_numbers<[1], [1], [0], [0], [0, 0, 1, 0], [], []>} : vector<16x32xf32>, vector<128x32xf32>, vector<16x128xf32> -> vector<16x128xf32>
    %94 = arith.addf %93, %88 : vector<16x128xf32>
    %cst_67 = arith.constant dense<0xFF800000> : vector<16xf32>
    %95 = vector.multi_reduction <maximumf>, %94, %cst_67 [1] : vector<16x128xf32> to vector<16xf32>
    %96 = vector.shape_cast %95 : vector<16xf32> to vector<16x1xf32>
    %97 = vector.broadcast %96 : vector<16x1xf32> to vector<16x128xf32>
    %98 = arith.subf %94, %97 : vector<16x128xf32>
    %99 = math.exp %98 : vector<16x128xf32>
    %cst_68 = arith.constant dense<0.000000e+00> : vector<16x128xf32>
    %100 = tpu.matmul %99, %87, %cst_68 {dimension_numbers = #tpu.dot_dimension_numbers<[1], [0], [0], [1], [0, 0, 1, 1], [], []>} : vector<16x128xf32>, vector<128x128xf32>, vector<16x128xf32> -> vector<16x128xf32>
    %cst_69 = arith.constant 9.99999968E-21 : f32
    %101 = vector.broadcast %cst_69 : f32 to vector<16x128xf32>
    %102 = arith.maximumf %100, %101 : vector<16x128xf32>
    %103 = tpu.reciprocal %102 {approx = true} : vector<16x128xf32> -> vector<16x128xf32>
    %104 = arith.mulf %99, %103 : vector<16x128xf32>
    %cst_70 = arith.constant dense<0.000000e+00> : vector<16x32xf32>
    %105 = tpu.matmul %104, %92, %cst_70 {dimension_numbers = #tpu.dot_dimension_numbers<[1], [0], [0], [1], [0, 0, 1, 1], [], []>} : vector<16x128xf32>, vector<128x32xf32>, vector<16x32xf32> -> vector<16x32xf32>
    %cst_71 = arith.constant dense<0.000000e+00> : vector<16x32xf32>
    %106 = tpu.matmul %105, %84, %cst_71 {dimension_numbers = #tpu.dot_dimension_numbers<[1], [0], [0], [1], [0, 0, 1, 1], [], []>} : vector<16x32xf32>, vector<32x32xf32>, vector<16x32xf32> -> vector<16x32xf32>
    %107 = vector.broadcast %85 : vector<1x32xf32> to vector<16x32xf32>
    %108 = arith.addf %106, %107 : vector<16x32xf32>
    %109 = arith.addf %66, %108 : vector<16x32xf32>
    %c0_72 = arith.constant 0 : index
    %c0_73 = arith.constant 0 : index
    %110 = vector.load %arg20[%c0_72, %c0_73] : memref<1x32xf32, #tpu.memory_space<vmem>>, vector<1x32xf32>
    %c0_74 = arith.constant 0 : index
    %c0_75 = arith.constant 0 : index
    %111 = vector.load %arg21[%c0_74, %c0_75] : memref<1x32xf32, #tpu.memory_space<vmem>>, vector<1x32xf32>
    %cst_76 = arith.constant dense<0.000000e+00> : vector<16xf32>
    %112 = vector.multi_reduction <add>, %109, %cst_76 [1] : vector<16x32xf32> to vector<16xf32>
    %113 = vector.shape_cast %112 : vector<16xf32> to vector<16x1xf32>
    %cst_77 = arith.constant 3.200000e+01 : f32
    %114 = vector.broadcast %cst_77 : f32 to vector<16x1xf32>
    %115 = arith.divf %113, %114 : vector<16x1xf32>
    %116 = vector.broadcast %115 : vector<16x1xf32> to vector<16x32xf32>
    %117 = arith.subf %109, %116 : vector<16x32xf32>
    %118 = arith.mulf %117, %117 : vector<16x32xf32>
    %cst_78 = arith.constant dense<0.000000e+00> : vector<16xf32>
    %119 = vector.multi_reduction <add>, %118, %cst_78 [1] : vector<16x32xf32> to vector<16xf32>
    %120 = vector.shape_cast %119 : vector<16xf32> to vector<16x1xf32>
    %cst_79 = arith.constant 3.200000e+01 : f32
    %121 = vector.broadcast %cst_79 : f32 to vector<16x1xf32>
    %122 = arith.divf %120, %121 : vector<16x1xf32>
    %123 = vector.broadcast %115 : vector<16x1xf32> to vector<16x32xf32>
    %124 = arith.subf %109, %123 : vector<16x32xf32>
    %cst_80 = arith.constant 9.99999974E-6 : f32
    %125 = vector.broadcast %cst_80 : f32 to vector<16x1xf32>
    %126 = arith.addf %122, %125 : vector<16x1xf32>
    %127 = math.rsqrt %126 : vector<16x1xf32>
    %128 = vector.broadcast %127 : vector<16x1xf32> to vector<16x32xf32>
    %129 = arith.mulf %124, %128 : vector<16x32xf32>
    %130 = vector.broadcast %110 : vector<1x32xf32> to vector<16x32xf32>
    %131 = arith.mulf %129, %130 : vector<16x32xf32>
    %132 = vector.broadcast %111 : vector<1x32xf32> to vector<16x32xf32>
    %133 = arith.addf %131, %132 : vector<16x32xf32>
    %c0_81 = arith.constant 0 : index
    %c0_82 = arith.constant 0 : index
    %134 = vector.load %arg28[%c0_81, %c0_82] : memref<16x32xf32, #tpu.memory_space<vmem>>, vector<16x32xf32>
    tpu.vector_store %arg28[%c0_81, %c0_82], %133 {strides = array<i32>} : memref<16x32xf32, #tpu.memory_space<vmem>>, vector<16x32xf32>,
    return
  }
}

</mosaic_0001>

<llo_original>
// kernel: transformer_decoder_layer_thin.1
$region0: #{transformer_decoder_layer_thin.1}
  #allocation0 [shape = 'u32[]', space=smem, size = 0x4, offset = 0x4, fixed_abs, tag = 'smem constant byte address 0x4 - core index']
  #allocation1 [shape = 'u32[144,128]{1,0:T(1,128)}', space=vmem, size = 0x12000, scoped, tag = 'internal scratch']
  %s0 = inlined_call_operand.vmem [shape: f32[16,32], index: 0, kind: input, shape index: {}]
  %s1 = inlined_call_operand.vmem [shape: f32[32,32], index: 1, kind: input, shape index: {}]
  %s2 = inlined_call_operand.vmem [shape: f32[16,32], index: 2, kind: input, shape index: {}]
  %s3 = inlined_call_operand.vmem [shape: f32[32,32], index: 3, kind: input, shape index: {}]
  %s4 = inlined_call_operand.vmem [shape: f32[32,64], index: 4, kind: input, shape index: {}]
  %s5 = inlined_call_operand.vmem [shape: f32[1,64], index: 5, kind: input, shape index: {}]
  %s6 = inlined_call_operand.vmem [shape: f32[32,32], index: 6, kind: input, shape index: {}]
  %s7 = inlined_call_operand.vmem [shape: f32[1,32], index: 7, kind: input, shape index: {}]
  %s8 = inlined_call_operand.vmem [shape: f32[32,32], index: 8, kind: input, shape index: {}]
  %s9 = inlined_call_operand.vmem [shape: f32[1,32], index: 9, kind: input, shape index: {}]
  %s10 = inlined_call_operand.vmem [shape: f32[32,32], index: 10, kind: input, shape index: {}]
  %s11 = inlined_call_operand.vmem [shape: f32[1,32], index: 11, kind: input, shape index: {}]
  %s12 = inlined_call_operand.vmem [shape: f32[32,32], index: 12, kind: input, shape index: {}]
  %s13 = inlined_call_operand.vmem [shape: f32[1,32], index: 13, kind: input, shape index: {}]
  %s14 = inlined_call_operand.vmem [shape: f32[32,32], index: 14, kind: input, shape index: {}]
  %s15 = inlined_call_operand.vmem [shape: f32[1,32], index: 15, kind: input, shape index: {}]
  %s16 = inlined_call_operand.vmem [shape: f32[32,32], index: 16, kind: input, shape index: {}]
  %s17 = inlined_call_operand.vmem [shape: f32[1,32], index: 17, kind: input, shape index: {}]
  %s18 = inlined_call_operand.vmem [shape: f32[1,32], index: 18, kind: input, shape index: {}]
  %s19 = inlined_call_operand.vmem [shape: f32[1,32], index: 19, kind: input, shape index: {}]
  %s20 = inlined_call_operand.vmem [shape: f32[1,32], index: 20, kind: input, shape index: {}]
  %s21 = inlined_call_operand.vmem [shape: f32[1,32], index: 21, kind: input, shape index: {}]
  %s22 = inlined_call_operand.vmem [shape: f32[64,32], index: 22, kind: input, shape index: {}]
  %s23 = inlined_call_operand.vmem [shape: f32[64,64], index: 23, kind: input, shape index: {}]
  %s24 = inlined_call_operand.vmem [shape: f32[16,64], index: 24, kind: input, shape index: {}]
  %s25 = inlined_call_operand.vmem [shape: f32[128,32], index: 25, kind: input, shape index: {}]
  %s26 = inlined_call_operand.vmem [shape: f32[128,128], index: 26, kind: input, shape index: {}]
  %s27 = inlined_call_operand.vmem [shape: f32[16,128], index: 27, kind: input, shape index: {}]
  %s28 = inlined_call_operand.hbm [shape: f32[16,32], index: 28, kind: output, shape index: {}]
  %s29 = sld [smem:[#allocation0]]
  $region122: #{transformer_decoder_layer_thin.1} parent=0
    _
  %s31 = ssub.s32 1, %s29
  %s32 = scalar_select 0, %s31, %s29
  $region1: #{transformer_decoder_layer_thin.1} parent=0
    #allocation2 [shape = 'u8[8192]{0}', space=vmem, size = 0x2000, scoped, tag = 'output window, operand 0, single buffered']
    #allocation3 [shape = 's32[1]{0}', space=sflag, size = 0x4, scoped, tag = 'scoped memory for transformer_decoder_layer_thin.1']
    %33 = vsyncpa [#allocation3], 0
    // Predicated region
    $region2: #{transformer_decoder_layer_thin.1} parent=1 // pred_check
      _
    $region3: #{transformer_decoder_layer_thin.1} parent=1 // pred_check_branch
      %35 = sbr.rel (0) target = $region5
    $region4: #{transformer_decoder_layer_thin.1} parent=1 // pred_region
      _
    $region5: #{transformer_decoder_layer_thin.1} parent=1 // pred_fallthru
      _
    // Predicated region
    $region6: #{transformer_decoder_layer_thin.1} parent=1 // pred_check
      _
    $region7: #{transformer_decoder_layer_thin.1} parent=1 // pred_check_branch
      %37 = sbr.rel (0) target = $region9
    $region8: #{transformer_decoder_layer_thin.1} parent=1 // pred_region
      _
    $region9: #{transformer_decoder_layer_thin.1} parent=1 // pred_fallthru
      _
    // Predicated region
    $region10: #{transformer_decoder_layer_thin.1} parent=1 // pred_check
      _
    $region11: #{transformer_decoder_layer_thin.1} parent=1 // pred_check_branch
      %39 = sbr.rel (0) target = $region13
    $region12: #{transformer_decoder_layer_thin.1} parent=1 // pred_region
      _
    $region13: #{transformer_decoder_layer_thin.1} parent=1 // pred_fallthru
      _
    // Predicated region
    $region14: #{transformer_decoder_layer_thin.1} parent=1 // pred_check
      _
    $region15: #{transformer_decoder_layer_thin.1} parent=1 // pred_check_branch
      %41 = sbr.rel (0) target = $region17
    $region16: #{transformer_decoder_layer_thin.1} parent=1 // pred_region
      _
    $region17: #{transformer_decoder_layer_thin.1} parent=1 // pred_fallthru
      _
    // Predicated region
    $region18: #{transformer_decoder_layer_thin.1} parent=1 // pred_check
      _
    $region19: #{transformer_decoder_layer_thin.1} parent=1 // pred_check_branch
      %43 = sbr.rel (0) target = $region21
    $region20: #{transformer_decoder_layer_thin.1} parent=1 // pred_region
      _
    $region21: #{transformer_decoder_layer_thin.1} parent=1 // pred_fallthru
      _
    // Predicated region
    $region22: #{transformer_decoder_layer_thin.1} parent=1 // pred_check
      _
    $region23: #{transformer_decoder_layer_thin.1} parent=1 // pred_check_branch
      %45 = sbr.rel (0) target = $region25
    $region24: #{transformer_decoder_layer_thin.1} parent=1 // pred_region
      _
    $region25: #{transformer_decoder_layer_thin.1} parent=1 // pred_fallthru
      _
    // Predicated region
    $region26: #{transformer_decoder_layer_thin.1} parent=1 // pred_check
      _
    $region27: #{transformer_decoder_layer_thin.1} parent=1 // pred_check_branch
      %47 = sbr.rel (0) target = $region29
    $region28: #{transformer_decoder_layer_thin.1} parent=1 // pred_region
      _
    $region29: #{transformer_decoder_layer_thin.1} parent=1 // pred_fallthru
      _
    // Predicated region
    $region30: #{transformer_decoder_layer_thin.1} parent=1 // pred_check
      _
    $region31: #{transformer_decoder_layer_thin.1} parent=1 // pred_check_branch
      %49 = sbr.rel (0) target = $region33
    $region32: #{transformer_decoder_layer_thin.1} parent=1 // pred_region
      _
    $region33: #{transformer_decoder_layer_thin.1} parent=1 // pred_fallthru
      _
    // Predicated region
    $region34: #{transformer_decoder_layer_thin.1} parent=1 // pred_check
      _
    $region35: #{transformer_decoder_layer_thin.1} parent=1 // pred_check_branch
      %51 = sbr.rel (0) target = $region37
    $region36: #{transformer_decoder_layer_thin.1} parent=1 // pred_region
      _
    $region37: #{transformer_decoder_layer_thin.1} parent=1 // pred_fallthru
      _
    // Predicated region
    $region38: #{transformer_decoder_layer_thin.1} parent=1 // pred_check
      _
    $region39: #{transformer_decoder_layer_thin.1} parent=1 // pred_check_branch
      %53 = sbr.rel (0) target = $region41
    $region40: #{transformer_decoder_layer_thin.1} parent=1 // pred_region
      _
    $region41: #{transformer_decoder_layer_thin.1} parent=1 // pred_fallthru
      _
    // Predicated region
    $region42: #{transformer_decoder_layer_thin.1} parent=1 // pred_check
      _
    $region43: #{transformer_decoder_layer_thin.1} parent=1 // pred_check_branch
      %55 = sbr.rel (0) target = $region45
    $region44: #{transformer_decoder_layer_thin.1} parent=1 // pred_region
      _
    $region45: #{transformer_decoder_layer_thin.1} parent=1 // pred_fallthru
      _
    // Predicated region
    $region46: #{transformer_decoder_layer_thin.1} parent=1 // pred_check
      _
    $region47: #{transformer_decoder_layer_thin.1} parent=1 // pred_check_branch
      %57 = sbr.rel (0) target = $region49
    $region48: #{transformer_decoder_layer_thin.1} parent=1 // pred_region
      _
    $region49: #{transformer_decoder_layer_thin.1} parent=1 // pred_fallthru
      _
    // Predicated region
    $region50: #{transformer_decoder_layer_thin.1} parent=1 // pred_check
      _
    $region51: #{transformer_decoder_layer_thin.1} parent=1 // pred_check_branch
      %59 = sbr.rel (0) target = $region53
    $region52: #{transformer_decoder_layer_thin.1} parent=1 // pred_region
      _
    $region53: #{transformer_decoder_layer_thin.1} parent=1 // pred_fallthru
      _
    // Predicated region
    $region54: #{transformer_decoder_layer_thin.1} parent=1 // pred_check
      _
    $region55: #{transformer_decoder_layer_thin.1} parent=1 // pred_check_branch
      %61 = sbr.rel (0) target = $region57
    $region56: #{transformer_decoder_layer_thin.1} parent=1 // pred_region
      _
    $region57: #{transformer_decoder_layer_thin.1} parent=1 // pred_fallthru
      _
    // Predicated region
    $region58: #{transformer_decoder_layer_thin.1} parent=1 // pred_check
      _
    $region59: #{transformer_decoder_layer_thin.1} parent=1 // pred_check_branch
      %63 = sbr.rel (0) target = $region61
    $region60: #{transformer_decoder_layer_thin.1} parent=1 // pred_region
      _
    $region61: #{transformer_decoder_layer_thin.1} parent=1 // pred_fallthru
      _
    // Predicated region
    $region62: #{transformer_decoder_layer_thin.1} parent=1 // pred_check
      _
    $region63: #{transformer_decoder_layer_thin.1} parent=1 // pred_check_branch
      %65 = sbr.rel (0) target = $region65
    $region64: #{transformer_decoder_layer_thin.1} parent=1 // pred_region
      _
    $region65: #{transformer_decoder_layer_thin.1} parent=1 // pred_fallthru
      _
    // Predicated region
    $region66: #{transformer_decoder_layer_thin.1} parent=1 // pred_check
      _
    $region67: #{transformer_decoder_layer_thin.1} parent=1 // pred_check_branch
      %67 = sbr.rel (0) target = $region69
    $region68: #{transformer_decoder_layer_thin.1} parent=1 // pred_region
      _
    $region69: #{transformer_decoder_layer_thin.1} parent=1 // pred_fallthru
      _
    // Predicated region
    $region70: #{transformer_decoder_layer_thin.1} parent=1 // pred_check
      _
    $region71: #{transformer_decoder_layer_thin.1} parent=1 // pred_check_branch
      %69 = sbr.rel (0) target = $region73
    $region72: #{transformer_decoder_layer_thin.1} parent=1 // pred_region
      _
    $region73: #{transformer_decoder_layer_thin.1} parent=1 // pred_fallthru
      _
    // Predicated region
    $region74: #{transformer_decoder_layer_thin.1} parent=1 // pred_check
      _
    $region75: #{transformer_decoder_layer_thin.1} parent=1 // pred_check_branch
      %71 = sbr.rel (0) target = $region77
    $region76: #{transformer_decoder_layer_thin.1} parent=1 // pred_region
      _
    $region77: #{transformer_decoder_layer_thin.1} parent=1 // pred_fallthru
      _
    // Predicated region
    $region78: #{transformer_decoder_layer_thin.1} parent=1 // pred_check
      _
    $region79: #{transformer_decoder_layer_thin.1} parent=1 // pred_check_branch
      %73 = sbr.rel (0) target = $region81
    $region80: #{transformer_decoder_layer_thin.1} parent=1 // pred_region
      _
    $region81: #{transformer_decoder_layer_thin.1} parent=1 // pred_fallthru
      _
    // Predicated region
    $region82: #{transformer_decoder_layer_thin.1} parent=1 // pred_check
      _
    $region83: #{transformer_decoder_layer_thin.1} parent=1 // pred_check_branch
      %75 = sbr.rel (0) target = $region85
    $region84: #{transformer_decoder_layer_thin.1} parent=1 // pred_region
      _
    $region85: #{transformer_decoder_layer_thin.1} parent=1 // pred_fallthru
      _
    // Predicated region
    $region86: #{transformer_decoder_layer_thin.1} parent=1 // pred_check
      _
    $region87: #{transformer_decoder_layer_thin.1} parent=1 // pred_check_branch
      %77 = sbr.rel (0) target = $region89
    $region88: #{transformer_decoder_layer_thin.1} parent=1 // pred_region
      _
    $region89: #{transformer_decoder_layer_thin.1} parent=1 // pred_fallthru
      _
    // Predicated region
    $region90: #{transformer_decoder_layer_thin.1} parent=1 // pred_check
      _
    $region91: #{transformer_decoder_layer_thin.1} parent=1 // pred_check_branch
      %79 = sbr.rel (0) target = $region93
    $region92: #{transformer_decoder_layer_thin.1} parent=1 // pred_region
      _
    $region93: #{transformer_decoder_layer_thin.1} parent=1 // pred_fallthru
      _
    // Predicated region
    $region94: #{transformer_decoder_layer_thin.1} parent=1 // pred_check
      _
    $region95: #{transformer_decoder_layer_thin.1} parent=1 // pred_check_branch
      %81 = sbr.rel (0) target = $region97
    $region96: #{transformer_decoder_layer_thin.1} parent=1 // pred_region
      _
    $region97: #{transformer_decoder_layer_thin.1} parent=1 // pred_fallthru
      _
    // Predicated region
    $region98: #{transformer_decoder_layer_thin.1} parent=1 // pred_check
      _
    $region99: #{transformer_decoder_layer_thin.1} parent=1 // pred_check_branch
      %83 = sbr.rel (0) target = $region101
    $region100: #{transformer_decoder_layer_thin.1} parent=1 // pred_region
      _
    $region101: #{transformer_decoder_layer_thin.1} parent=1 // pred_fallthru
      _
    // Predicated region
    $region102: #{transformer_decoder_layer_thin.1} parent=1 // pred_check
      _
    $region103: #{transformer_decoder_layer_thin.1} parent=1 // pred_check_branch
      %85 = sbr.rel (0) target = $region105
    $region104: #{transformer_decoder_layer_thin.1} parent=1 // pred_region
      _
    $region105: #{transformer_decoder_layer_thin.1} parent=1 // pred_fallthru
      _
    // Predicated region
    $region106: #{transformer_decoder_layer_thin.1} parent=1 // pred_check
      _
    $region107: #{transformer_decoder_layer_thin.1} parent=1 // pred_check_branch
      %87 = sbr.rel (0) target = $region109
    $region108: #{transformer_decoder_layer_thin.1} parent=1 // pred_region
      _
    $region109: #{transformer_decoder_layer_thin.1} parent=1 // pred_fallthru
      _
    // Predicated region
    $region110: #{transformer_decoder_layer_thin.1} parent=1 // pred_check
      _
    $region111: #{transformer_decoder_layer_thin.1} parent=1 // pred_check_branch
      %89 = sbr.rel (0) target = $region113
    $region112: #{transformer_decoder_layer_thin.1} parent=1 // pred_region
      _
    $region113: #{transformer_decoder_layer_thin.1} parent=1 // pred_fallthru
      _
    %v90 = vld [vmem:[%s0] sm:$0xff]
    %v91 = vld [vmem:[%s0 + $0x8] sm:$0xff]
    %v92 = vld [vmem:[%s1] sm:$0xff]
    %v93 = vld [vmem:[%s1 + $0x8] sm:$0xff]
    %v94 = vld [vmem:[%s1 + $0x10] sm:$0xff]
    %v95 = vld [vmem:[%s1 + $0x18] sm:$0xff]
    %v96 = vld [vmem:[%s2] sm:$0xff]
    %v97 = vld [vmem:[%s2 + $0x8] sm:$0xff]
    %v98 = vld [vmem:[%s3] sm:$0xff]
    %v99 = vld [vmem:[%s3 + $0x8] sm:$0xff]
    %v100 = vld [vmem:[%s3 + $0x10] sm:$0xff]
    %v101 = vld [vmem:[%s3 + $0x18] sm:$0xff]
    %v102 = vadd.f32 %v90, %v96
    %v103 = vadd.f32 %v91, %v97
    %v104 = vld [vmem:[%s4] sm:$0xff]
    %v105 = vld [vmem:[%s4 + $0x8] sm:$0xff]
    %v106 = vld [vmem:[%s4 + $0x10] sm:$0xff]
    %v107 = vld [vmem:[%s4 + $0x18] sm:$0xff]
    %v108 = vld [vmem:[%s5] sm:$0x1]
    %v110 = vlaneseq
    %v111 = vshrl.u32 %v110, 7
    %v112 = vsub.s32 0, %v111
    %v113 = vrot.slane %v108, %v112
    %vm115 = vcmask 261120
    %v117 = vsel %vm115, %v102, 0
    %v120 = vsel %vm115, %v103, 0
    %122 = vmatprep.subr.mxu0 0.0
    %123 = vmatpush1.msra.mxu0 %v104
    %124 = vmatprep.subr.mxu0 0.0
    %125 = vmatpush1.msra.mxu0 %v105
    %126 = vmatprep.subr.mxu0 0.0
    %127 = vmatpush1.msra.mxu0 %v106
    %128 = vmatprep.subr.mxu0 0.0
    %129 = vmatpush1.msra.mxu0 %v107
    %130 = vmatprep.subr.mxu0 0.0
    %131 = vmatpush1.msra.mxu0 0.0
    %132 = vmatprep.subr.mxu0 0.0
    %133 = vmatpush1.msra.mxu0 0.0
    %134 = vmatprep.subr.mxu0 0.0
    %135 = vmatpush1.msra.mxu0 0.0
    %136 = vmatprep.subr.mxu0 0.0
    %137 = vmatpush1.msra.mxu0 0.0
    %138 = vmatprep.subr.mxu0 0.0
    %139 = vmatpush1.msra.mxu0 0.0
    %140 = vmatprep.subr.mxu0 0.0
    %141 = vmatpush1.msra.mxu0 0.0
    %142 = vmatprep.subr.mxu0 0.0
    %143 = vmatpush1.msra.mxu0 0.0
    %144 = vmatprep.subr.mxu0 0.0
    %145 = vmatpush1.msra.mxu0 0.0
    %146 = vmatprep.subr.mxu0 0.0
    %147 = vmatpush1.msra.mxu0 0.0
    %148 = vmatprep.subr.mxu0 0.0
    %149 = vmatpush1.msra.mxu0 0.0
    %150 = vmatprep.subr.mxu0 0.0
    %151 = vmatpush1.msra.mxu0 0.0
    %152 = vmatprep.subr.mxu0 0.0
    %153 = vmatpush1.msra.mxu0 0.0
    %154 = vmatprep.subr.mxu0 0.0
    %155 = vmatpush1.msra.mxu0 0.0
    %156 = vmatprep.subr.mxu0 0.0
    %157 = vmatpush1.msra.mxu0 0.0
    %158 = vmatprep.subr.mxu0 0.0
    %159 = vmatpush1.msra.mxu0 0.0
    %160 = vmatprep.subr.mxu0 0.0
    %161 = vmatpush1.msra.mxu0 0.0
    %162 = vmatprep.subr.mxu0 0.0
    %163 = vmatpush1.msra.mxu0 0.0
    %164 = vmatprep.subr.mxu0 0.0
    %165 = vmatpush1.msra.mxu0 0.0
    %166 = vmatprep.subr.mxu0 0.0
    %167 = vmatpush1.msra.mxu0 0.0
    %168 = vmatprep.subr.mxu0 0.0
    %169 = vmatpush1.msra.mxu0 0.0
    %170 = vmatprep.subr.mxu0 0.0
    %171 = vmatpush1.msra.mxu0 0.0
    %172 = vmatprep.subr.mxu0 0.0
    %173 = vmatpush1.msra.mxu0 0.0
    %174 = vmatprep.subr.mxu0 0.0
    %175 = vmatpush1.msra.mxu0 0.0
    %176 = vmatprep.subr.mxu0 0.0
    %177 = vmatpush1.msra.mxu0 0.0
    %178 = vmatprep.subr.mxu0 0.0
    %179 = vmatpush1.msra.mxu0 0.0
    %180 = vmatprep.subr.mxu0 0.0
    %181 = vmatpush1.msra.mxu0 0.0
    %182 = vmatprep.subr.mxu0 0.0
    %183 = vmatpush1.msra.mxu0 0.0
    %184 = vmatprep.subr.mxu0 0.0
    %185 = vmatpush1.msra.mxu0 0.0
    %186 = vmatprep.mubr.f32.mxu0 0.0
    %187 = vmatmul.mubr.f32.gmra.mrb[0].mxu0 %v117
    %v188 = vpop.f32.mrb[0].mxu0
    %v189 = vadd.f32 %v113, %v188
    %v190 = vpop.f32.mrb[0].mxu0
    %191 = vmatprep.mubr.f32.mxu0 0.0
    %192 = vmatmul.mubr.f32.gmra.mrb[0].mxu0 %v120
    %v193 = vpop.f32.mrb[0].mxu0
    %v194 = vadd.f32 %v113, %v193
    %v195 = vpop.f32.mrb[0].mxu0
    %196 = vdwg.mxu0
    %v197 = vld [vmem:[%s6] sm:$0xff]
    %v198 = vld [vmem:[%s6 + $0x8] sm:$0xff]
    %v199 = vld [vmem:[%s6 + $0x10] sm:$0xff]
    %v200 = vld [vmem:[%s6 + $0x18] sm:$0xff]
    %v201 = vld [vmem:[%s7] sm:$0x1]
    %v203 = vlaneseq
    %v204 = vshrl.u32 %v203, 7
    %v205 = vsub.s32 0, %v204
    %v206 = vrot.slane %v201, %v205
    %v209 = vsel %vm115, %v90, 0
    %v212 = vsel %vm115, %v91, 0
    %214 = vmatprep.subr.mxu0 0.0
    %215 = vmatpush1.msra.mxu0 %v197
    %216 = vmatprep.subr.mxu0 0.0
    %217 = vmatpush1.msra.mxu0 %v198
    %218 = vmatprep.subr.mxu0 0.0
    %219 = vmatpush1.msra.mxu0 %v199
    %220 = vmatprep.subr.mxu0 0.0
    %221 = vmatpush1.msra.mxu0 %v200
    %222 = vmatprep.subr.mxu0 0.0
    %223 = vmatpush1.msra.mxu0 0.0
    %224 = vmatprep.subr.mxu0 0.0
    %225 = vmatpush1.msra.mxu0 0.0
    %226 = vmatprep.subr.mxu0 0.0
    %227 = vmatpush1.msra.mxu0 0.0
    %228 = vmatprep.subr.mxu0 0.0
    %229 = vmatpush1.msra.mxu0 0.0
    %230 = vmatprep.subr.mxu0 0.0
    %231 = vmatpush1.msra.mxu0 0.0
    %232 = vmatprep.subr.mxu0 0.0
    %233 = vmatpush1.msra.mxu0 0.0
    %234 = vmatprep.subr.mxu0 0.0
    %235 = vmatpush1.msra.mxu0 0.0
    %236 = vmatprep.subr.mxu0 0.0
    %237 = vmatpush1.msra.mxu0 0.0
    %238 = vmatprep.subr.mxu0 0.0
    %239 = vmatpush1.msra.mxu0 0.0
    %240 = vmatprep.subr.mxu0 0.0
    %241 = vmatpush1.msra.mxu0 0.0
    %242 = vmatprep.subr.mxu0 0.0
    %243 = vmatpush1.msra.mxu0 0.0
    %244 = vmatprep.subr.mxu0 0.0
    %245 = vmatpush1.msra.mxu0 0.0
    %246 = vmatprep.subr.mxu0 0.0
    %247 = vmatpush1.msra.mxu0 0.0
    %248 = vmatprep.subr.mxu0 0.0
    %249 = vmatpush1.msra.mxu0 0.0
    %250 = vmatprep.subr.mxu0 0.0
    %251 = vmatpush1.msra.mxu0 0.0
    %252 = vmatprep.subr.mxu0 0.0
    %253 = vmatpush1.msra.mxu0 0.0
    %254 = vmatprep.subr.mxu0 0.0
    %255 = vmatpush1.msra.mxu0 0.0
    %256 = vmatprep.subr.mxu0 0.0
    %257 = vmatpush1.msra.mxu0 0.0
    %258 = vmatprep.subr.mxu0 0.0
    %259 = vmatpush1.msra.mxu0 0.0
    %260 = vmatprep.subr.mxu0 0.0
    %261 = vmatpush1.msra.mxu0 0.0
    %262 = vmatprep.subr.mxu0 0.0
    %263 = vmatpush1.msra.mxu0 0.0
    %264 = vmatprep.subr.mxu0 0.0
    %265 = vmatpush1.msra.mxu0 0.0
    %266 = vmatprep.subr.mxu0 0.0
    %267 = vmatpush1.msra.mxu0 0.0
    %268 = vmatprep.subr.mxu0 0.0
    %269 = vmatpush1.msra.mxu0 0.0
    %270 = vmatprep.subr.mxu0 0.0
    %271 = vmatpush1.msra.mxu0 0.0
    %272 = vmatprep.subr.mxu0 0.0
    %273 = vmatpush1.msra.mxu0 0.0
    %274 = vmatprep.subr.mxu0 0.0
    %275 = vmatpush1.msra.mxu0 0.0
    %276 = vmatprep.subr.mxu0 0.0
    %277 = vmatpush1.msra.mxu0 0.0
    %278 = vmatprep.mubr.f32.mxu0 0.0
    %279 = vmatmul.mubr.f32.gmra.mrb[0].mxu0 %v209
    %v280 = vpop.f32.mrb[0].mxu0
    %v281 = vadd.f32 %v206, %v280
    %v282 = vpop.f32.mrb[0].mxu0
    %283 = vmatprep.mubr.f32.mxu0 0.0
    %284 = vmatmul.mubr.f32.gmra.mrb[0].mxu0 %v212
    %v285 = vpop.f32.mrb[0].mxu0
    %v286 = vadd.f32 %v206, %v285
    %v287 = vpop.f32.mrb[0].mxu0
    %288 = vdwg.mxu0
    %v289 = vld [vmem:[%s8] sm:$0xff]
    %v290 = vld [vmem:[%s8 + $0x8] sm:$0xff]
    %v291 = vld [vmem:[%s8 + $0x10] sm:$0xff]
    %v292 = vld [vmem:[%s8 + $0x18] sm:$0xff]
    %v293 = vld [vmem:[%s9] sm:$0x1]
    %v294 = vld [vmem:[%s22] sm:$0xff]
    %v295 = vld [vmem:[%s22 + $0x8] sm:$0xff]
    %v296 = vld [vmem:[%s22 + $0x10] sm:$0xff]
    %v297 = vld [vmem:[%s22 + $0x18] sm:$0xff]
    %v298 = vld [vmem:[%s22 + $0x20] sm:$0xff]
    %v299 = vld [vmem:[%s22 + $0x28] sm:$0xff]
    %v300 = vld [vmem:[%s22 + $0x30] sm:$0xff]
    %v301 = vld [vmem:[%s22 + $0x38] sm:$0xff]
    %v302 = vld [vmem:[%s23] sm:$0xff]
    %v303 = vld [vmem:[%s23 + $0x8] sm:$0xff]
    %v304 = vld [vmem:[%s23 + $0x10] sm:$0xff]
    %v305 = vld [vmem:[%s23 + $0x18] sm:$0xff]
    %v306 = vld [vmem:[%s23 + $0x20] sm:$0xff]
    %v307 = vld [vmem:[%s23 + $0x28] sm:$0xff]
    %v308 = vld [vmem:[%s23 + $0x30] sm:$0xff]
    %v309 = vld [vmem:[%s23 + $0x38] sm:$0xff]
    %v310 = vld [vmem:[%s24] sm:$0xff]
    %v311 = vld [vmem:[%s24 + $0x8] sm:$0xff]
    %320 = vrot.lane.b32.xlu0 %v294, 32
    %v321 = vpop.permute.xlu0 %320
    %322 = vrot.lane.b32.xlu0 %v295, 32
    %v323 = vpop.permute.xlu0 %322
    %324 = vrot.lane.b32.xlu0 %v296, 32
    %v325 = vpop.permute.xlu0 %324
    %326 = vrot.lane.b32.xlu0 %v297, 32
    %v327 = vpop.permute.xlu0 %326
    %328 = vrot.lane.b32.xlu0 %v298, 32
    %v329 = vpop.permute.xlu0 %328
    %330 = vrot.lane.b32.xlu0 %v299, 32
    %v331 = vpop.permute.xlu0 %330
    %332 = vrot.lane.b32.xlu0 %v300, 32
    %v333 = vpop.permute.xlu0 %332
    %334 = vrot.lane.b32.xlu0 %v301, 32
    %v335 = vpop.permute.xlu0 %334
    %v344 = vmul.f32 %v189, %v321
    %v345 = vmul.f32 %v194, %v323
    %v346 = vmul.f32 %v189, %v325
    %v347 = vmul.f32 %v194, %v327
    %v348 = vmul.f32 %v189, %v329
    %v349 = vmul.f32 %v194, %v331
    %v350 = vmul.f32 %v189, %v333
    %v351 = vmul.f32 %v194, %v335
    %v352 = vmul.f32 %v281, %v294
    %v353 = vmul.f32 %v286, %v295
    %v354 = vmul.f32 %v281, %v296
    %v355 = vmul.f32 %v286, %v297
    %v356 = vmul.f32 %v281, %v298
    %v357 = vmul.f32 %v286, %v299
    %v358 = vmul.f32 %v281, %v300
    %v359 = vmul.f32 %v286, %v301
    %368 = vrot.lane.b32.xlu0 %v344, 96
    %v369 = vpop.permute.xlu0 %368
    %370 = vrot.lane.b32.xlu0 %v345, 96
    %v371 = vpop.permute.xlu0 %370
    %372 = vrot.lane.b32.xlu0 %v346, 96
    %v373 = vpop.permute.xlu0 %372
    %374 = vrot.lane.b32.xlu0 %v347, 96
    %v375 = vpop.permute.xlu0 %374
    %376 = vrot.lane.b32.xlu0 %v348, 96
    %v377 = vpop.permute.xlu0 %376
    %378 = vrot.lane.b32.xlu0 %v349, 96
    %v379 = vpop.permute.xlu0 %378
    %380 = vrot.lane.b32.xlu0 %v350, 96
    %v381 = vpop.permute.xlu0 %380
    %382 = vrot.lane.b32.xlu0 %v351, 96
    %v383 = vpop.permute.xlu0 %382
    %v385 = vsel %vm115, %v189, 0
    %v388 = vsel %vm115, %v194, 0
    %v390 = vsel %vm115, %v369, 0
    %v392 = vsel %vm115, %v371, 0
    %v394 = vsel %vm115, %v373, 0
    %v396 = vsel %vm115, %v375, 0
    %v398 = vsel %vm115, %v377, 0
    %v400 = vsel %vm115, %v379, 0
    %v402 = vsel %vm115, %v381, 0
    %v404 = vsel %vm115, %v383, 0
    %406 = vmatprep.subr.mxu0 0.0
    %407 = vmatpush1.xpose.msra.mxu0 %v390
    %408 = vmatprep.subr.mxu0 0.0
    %409 = vmatpush1.xpose.msra.mxu0 %v392
    %410 = vmatprep.subr.mxu0 0.0
    %411 = vmatpush1.xpose.msra.mxu0 %v394
    %412 = vmatprep.subr.mxu0 0.0
    %413 = vmatpush1.xpose.msra.mxu0 %v396
    %414 = vmatprep.subr.mxu0 0.0
    %415 = vmatpush1.xpose.msra.mxu0 %v398
    %416 = vmatprep.subr.mxu0 0.0
    %417 = vmatpush1.xpose.msra.mxu0 %v400
    %418 = vmatprep.subr.mxu0 0.0
    %419 = vmatpush1.xpose.msra.mxu0 %v402
    %420 = vmatprep.subr.mxu0 0.0
    %421 = vmatpush1.xpose.msra.mxu0 %v404
    %422 = vmatprep.subr.mxu0 0.0
    %423 = vmatpush1.xpose.msra.mxu0 0.0
    %424 = vmatprep.subr.mxu0 0.0
    %425 = vmatpush1.xpose.msra.mxu0 0.0
    %426 = vmatprep.subr.mxu0 0.0
    %427 = vmatpush1.xpose.msra.mxu0 0.0
    %428 = vmatprep.subr.mxu0 0.0
    %429 = vmatpush1.xpose.msra.mxu0 0.0
    %430 = vmatprep.subr.mxu0 0.0
    %431 = vmatpush1.xpose.msra.mxu0 0.0
    %432 = vmatprep.subr.mxu0 0.0
    %433 = vmatpush1.xpose.msra.mxu0 0.0
    %434 = vmatprep.subr.mxu0 0.0
    %435 = vmatpush1.xpose.msra.mxu0 0.0
    %436 = vmatprep.subr.mxu0 0.0
    %437 = vmatpush1.xpose.msra.mxu0 0.0
    %438 = vmatprep.subr.mxu0 0.0
    %439 = vmatpush1.xpose.msra.mxu0 0.0
    %440 = vmatprep.subr.mxu0 0.0
    %441 = vmatpush1.xpose.msra.mxu0 0.0
    %442 = vmatprep.subr.mxu0 0.0
    %443 = vmatpush1.xpose.msra.mxu0 0.0
    %444 = vmatprep.subr.mxu0 0.0
    %445 = vmatpush1.xpose.msra.mxu0 0.0
    %446 = vmatprep.subr.mxu0 0.0
    %447 = vmatpush1.xpose.msra.mxu0 0.0
    %448 = vmatprep.subr.mxu0 0.0
    %449 = vmatpush1.xpose.msra.mxu0 0.0
    %450 = vmatprep.subr.mxu0 0.0
    %451 = vmatpush1.xpose.msra.mxu0 0.0
    %452 = vmatprep.subr.mxu0 0.0
    %453 = vmatpush1.xpose.msra.mxu0 0.0
    %454 = vmatprep.subr.mxu0 0.0
    %455 = vmatpush1.xpose.msra.mxu0 0.0
    %456 = vmatprep.subr.mxu0 0.0
    %457 = vmatpush1.xpose.msra.mxu0 0.0
    %458 = vmatprep.subr.mxu0 0.0
    %459 = vmatpush1.xpose.msra.mxu0 0.0
    %460 = vmatprep.subr.mxu0 0.0
    %461 = vmatpush1.xpose.msra.mxu0 0.0
    %462 = vmatprep.subr.mxu0 0.0
    %463 = vmatpush1.xpose.msra.mxu0 0.0
    %464 = vmatprep.subr.mxu0 0.0
    %465 = vmatpush1.xpose.msra.mxu0 0.0
    %466 = vmatprep.subr.mxu0 0.0
    %467 = vmatpush1.xpose.msra.mxu0 0.0
    %468 = vmatprep.subr.mxu0 0.0
    %469 = vmatpush1.xpose.msra.mxu0 0.0
    %470 = vmatprep.mubr.f32.mxu0 0.0
    %471 = vmatmul.mubr.f32.gmra.mrb[0].mxu0 %v385
    %v472 = vpop.f32.mrb[0].mxu0
    %v473 = vadd.f32 %v310, %v472
    %v474 = vpop.f32.mrb[0].mxu0
    %475 = vmatprep.mubr.f32.mxu0 0.0
    %476 = vmatmul.mubr.f32.gmra.mrb[0].mxu0 %v388
    %v477 = vpop.f32.mrb[0].mxu0
    %v478 = vadd.f32 %v311, %v477
    %v479 = vpop.f32.mrb[0].mxu0
    %480 = vdwg.mxu0
    %vm481 = vcmask 523264
    %v482 = vsel %vm481, %v473, -inf
    %483 = vmax.xlane.f32.xlu0 %v482
    %v484 = vpop.xlane.xlu0 %483
    %v485 = vsel %vm481, %v478, -inf
    %486 = vmax.xlane.f32.xlu0 %v485
    %v487 = vpop.xlane.xlu0 %486
    %v488 = vsub.f32 %v473, %v484
    %v489 = vsub.f32 %v478, %v487
    %v490 = vmul.f32 %v488, 1.442695
    %v491 = vpow.pop %v490
    %v492 = vmul.f32 %v489, 1.442695
    %v493 = vpow.pop %v492
    %v495 = vsel %vm481, %v491, 0
    %v498 = vsel %vm481, %v493, 0
    %500 = vmatprep.subr.mxu0 0.0
    %501 = vmatpush1.msra.mxu0 %v302
    %502 = vmatprep.subr.mxu0 0.0
    %503 = vmatpush1.msra.mxu0 %v303
    %504 = vmatprep.subr.mxu0 0.0
    %505 = vmatpush1.msra.mxu0 %v304
    %506 = vmatprep.subr.mxu0 0.0
    %507 = vmatpush1.msra.mxu0 %v305
    %508 = vmatprep.subr.mxu0 0.0
    %509 = vmatpush1.msra.mxu0 %v306
    %510 = vmatprep.subr.mxu0 0.0
    %511 = vmatpush1.msra.mxu0 %v307
    %512 = vmatprep.subr.mxu0 0.0
    %513 = vmatpush1.msra.mxu0 %v308
    %514 = vmatprep.subr.mxu0 0.0
    %515 = vmatpush1.msra.mxu0 %v309
    %516 = vmatprep.subr.mxu0 0.0
    %517 = vmatpush1.msra.mxu0 0.0
    %518 = vmatprep.subr.mxu0 0.0
    %519 = vmatpush1.msra.mxu0 0.0
    %520 = vmatprep.subr.mxu0 0.0
    %521 = vmatpush1.msra.mxu0 0.0
    %522 = vmatprep.subr.mxu0 0.0
    %523 = vmatpush1.msra.mxu0 0.0
    %524 = vmatprep.subr.mxu0 0.0
    %525 = vmatpush1.msra.mxu0 0.0
    %526 = vmatprep.subr.mxu0 0.0
    %527 = vmatpush1.msra.mxu0 0.0
    %528 = vmatprep.subr.mxu0 0.0
    %529 = vmatpush1.msra.mxu0 0.0
    %530 = vmatprep.subr.mxu0 0.0
    %531 = vmatpush1.msra.mxu0 0.0
    %532 = vmatprep.subr.mxu0 0.0
    %533 = vmatpush1.msra.mxu0 0.0
    %534 = vmatprep.subr.mxu0 0.0
    %535 = vmatpush1.msra.mxu0 0.0
    %536 = vmatprep.subr.mxu0 0.0
    %537 = vmatpush1.msra.mxu0 0.0
    %538 = vmatprep.subr.mxu0 0.0
    %539 = vmatpush1.msra.mxu0 0.0
    %540 = vmatprep.subr.mxu0 0.0
    %541 = vmatpush1.msra.mxu0 0.0
    %542 = vmatprep.subr.mxu0 0.0
    %543 = vmatpush1.msra.mxu0 0.0
    %544 = vmatprep.subr.mxu0 0.0
    %545 = vmatpush1.msra.mxu0 0.0
    %546 = vmatprep.subr.mxu0 0.0
    %547 = vmatpush1.msra.mxu0 0.0
    %548 = vmatprep.subr.mxu0 0.0
    %549 = vmatpush1.msra.mxu0 0.0
    %550 = vmatprep.subr.mxu0 0.0
    %551 = vmatpush1.msra.mxu0 0.0
    %552 = vmatprep.subr.mxu0 0.0
    %553 = vmatpush1.msra.mxu0 0.0
    %554 = vmatprep.subr.mxu0 0.0
    %555 = vmatpush1.msra.mxu0 0.0
    %556 = vmatprep.subr.mxu0 0.0
    %557 = vmatpush1.msra.mxu0 0.0
    %558 = vmatprep.subr.mxu0 0.0
    %559 = vmatpush1.msra.mxu0 0.0
    %560 = vmatprep.subr.mxu0 0.0
    %561 = vmatpush1.msra.mxu0 0.0
    %562 = vmatprep.subr.mxu0 0.0
    %563 = vmatpush1.msra.mxu0 0.0
    %564 = vmatprep.mubr.f32.mxu0 0.0
    %565 = vmatmul.mubr.f32.gmra.mrb[0].mxu0 %v495
    %v566 = vpop.f32.mrb[0].mxu0
    %v567 = vadd.f32 0.0, %v566
    %v568 = vpop.f32.mrb[0].mxu0
    %569 = vmatprep.mubr.f32.mxu0 0.0
    %570 = vmatmul.mubr.f32.gmra.mrb[0].mxu0 %v498
    %v571 = vpop.f32.mrb[0].mxu0
    %v572 = vadd.f32 0.0, %v571
    %v573 = vpop.f32.mrb[0].mxu0
    %574 = vdwg.mxu0
    %v575 = vmax.f32 %v567, 1e-20
    %v576 = vmax.f32 %v572, 1e-20
    %v577 = vrcp.pop %v575
    %v578 = vrcp.pop %v576
    %v579 = vmul.f32 %v491, %v577
    %v580 = vmul.f32 %v493, %v578
    %v582 = vsel %vm481, %v579, 0
    %v585 = vsel %vm481, %v580, 0
    %587 = vmatprep.subr.mxu0 0.0
    %588 = vmatpush1.msra.mxu0 %v352
    %589 = vmatprep.subr.mxu0 0.0
    %590 = vmatpush1.msra.mxu0 %v353
    %591 = vmatprep.subr.mxu0 0.0
    %592 = vmatpush1.msra.mxu0 %v354
    %593 = vmatprep.subr.mxu0 0.0
    %594 = vmatpush1.msra.mxu0 %v355
    %595 = vmatprep.subr.mxu0 0.0
    %596 = vmatpush1.msra.mxu0 %v356
    %597 = vmatprep.subr.mxu0 0.0
    %598 = vmatpush1.msra.mxu0 %v357
    %599 = vmatprep.subr.mxu0 0.0
    %600 = vmatpush1.msra.mxu0 %v358
    %601 = vmatprep.subr.mxu0 0.0
    %602 = vmatpush1.msra.mxu0 %v359
    %603 = vmatprep.subr.mxu0 0.0
    %604 = vmatpush1.msra.mxu0 0.0
    %605 = vmatprep.subr.mxu0 0.0
    %606 = vmatpush1.msra.mxu0 0.0
    %607 = vmatprep.subr.mxu0 0.0
    %608 = vmatpush1.msra.mxu0 0.0
    %609 = vmatprep.subr.mxu0 0.0
    %610 = vmatpush1.msra.mxu0 0.0
    %611 = vmatprep.subr.mxu0 0.0
    %612 = vmatpush1.msra.mxu0 0.0
    %613 = vmatprep.subr.mxu0 0.0
    %614 = vmatpush1.msra.mxu0 0.0
    %615 = vmatprep.subr.mxu0 0.0
    %616 = vmatpush1.msra.mxu0 0.0
    %617 = vmatprep.subr.mxu0 0.0
    %618 = vmatpush1.msra.mxu0 0.0
    %619 = vmatprep.subr.mxu0 0.0
    %620 = vmatpush1.msra.mxu0 0.0
    %621 = vmatprep.subr.mxu0 0.0
    %622 = vmatpush1.msra.mxu0 0.0
    %623 = vmatprep.subr.mxu0 0.0
    %624 = vmatpush1.msra.mxu0 0.0
    %625 = vmatprep.subr.mxu0 0.0
    %626 = vmatpush1.msra.mxu0 0.0
    %627 = vmatprep.subr.mxu0 0.0
    %628 = vmatpush1.msra.mxu0 0.0
    %629 = vmatprep.subr.mxu0 0.0
    %630 = vmatpush1.msra.mxu0 0.0
    %631 = vmatprep.subr.mxu0 0.0
    %632 = vmatpush1.msra.mxu0 0.0
    %633 = vmatprep.subr.mxu0 0.0
    %634 = vmatpush1.msra.mxu0 0.0
    %635 = vmatprep.subr.mxu0 0.0
    %636 = vmatpush1.msra.mxu0 0.0
    %637 = vmatprep.subr.mxu0 0.0
    %638 = vmatpush1.msra.mxu0 0.0
    %639 = vmatprep.subr.mxu0 0.0
    %640 = vmatpush1.msra.mxu0 0.0
    %641 = vmatprep.subr.mxu0 0.0
    %642 = vmatpush1.msra.mxu0 0.0
    %643 = vmatprep.subr.mxu0 0.0
    %644 = vmatpush1.msra.mxu0 0.0
    %645 = vmatprep.subr.mxu0 0.0
    %646 = vmatpush1.msra.mxu0 0.0
    %647 = vmatprep.subr.mxu0 0.0
    %648 = vmatpush1.msra.mxu0 0.0
    %649 = vmatprep.subr.mxu0 0.0
    %650 = vmatpush1.msra.mxu0 0.0
    %651 = vmatprep.mubr.f32.mxu0 0.0
    %652 = vmatmul.mubr.f32.gmra.mrb[0].mxu0 %v582
    %v653 = vpop.f32.mrb[0].mxu0
    %v654 = vadd.f32 0.0, %v653
    %v655 = vpop.f32.mrb[0].mxu0
    %656 = vmatprep.mubr.f32.mxu0 0.0
    %657 = vmatmul.mubr.f32.gmra.mrb[0].mxu0 %v585
    %v658 = vpop.f32.mrb[0].mxu0
    %v659 = vadd.f32 0.0, %v658
    %v660 = vpop.f32.mrb[0].mxu0
    %661 = vdwg.mxu0
    %v663 = vlaneseq
    %v664 = vshrl.u32 %v663, 7
    %v665 = vsub.s32 0, %v664
    %v666 = vrot.slane %v293, %v665
    %v669 = vsel %vm115, %v654, 0
    %v672 = vsel %vm115, %v659, 0
    %674 = vmatprep.subr.mxu0 0.0
    %675 = vmatpush1.msra.mxu0 %v289
    %676 = vmatprep.subr.mxu0 0.0
    %677 = vmatpush1.msra.mxu0 %v290
    %678 = vmatprep.subr.mxu0 0.0
    %679 = vmatpush1.msra.mxu0 %v291
    %680 = vmatprep.subr.mxu0 0.0
    %681 = vmatpush1.msra.mxu0 %v292
    %682 = vmatprep.subr.mxu0 0.0
    %683 = vmatpush1.msra.mxu0 0.0
    %684 = vmatprep.subr.mxu0 0.0
    %685 = vmatpush1.msra.mxu0 0.0
    %686 = vmatprep.subr.mxu0 0.0
    %687 = vmatpush1.msra.mxu0 0.0
    %688 = vmatprep.subr.mxu0 0.0
    %689 = vmatpush1.msra.mxu0 0.0
    %690 = vmatprep.subr.mxu0 0.0
    %691 = vmatpush1.msra.mxu0 0.0
    %692 = vmatprep.subr.mxu0 0.0
    %693 = vmatpush1.msra.mxu0 0.0
    %694 = vmatprep.subr.mxu0 0.0
    %695 = vmatpush1.msra.mxu0 0.0
    %696 = vmatprep.subr.mxu0 0.0
    %697 = vmatpush1.msra.mxu0 0.0
    %698 = vmatprep.subr.mxu0 0.0
    %699 = vmatpush1.msra.mxu0 0.0
    %700 = vmatprep.subr.mxu0 0.0
    %701 = vmatpush1.msra.mxu0 0.0
    %702 = vmatprep.subr.mxu0 0.0
    %703 = vmatpush1.msra.mxu0 0.0
    %704 = vmatprep.subr.mxu0 0.0
    %705 = vmatpush1.msra.mxu0 0.0
    %706 = vmatprep.subr.mxu0 0.0
    %707 = vmatpush1.msra.mxu0 0.0
    %708 = vmatprep.subr.mxu0 0.0
    %709 = vmatpush1.msra.mxu0 0.0
    %710 = vmatprep.subr.mxu0 0.0
    %711 = vmatpush1.msra.mxu0 0.0
    %712 = vmatprep.subr.mxu0 0.0
    %713 = vmatpush1.msra.mxu0 0.0
    %714 = vmatprep.subr.mxu0 0.0
    %715 = vmatpush1.msra.mxu0 0.0
    %716 = vmatprep.subr.mxu0 0.0
    %717 = vmatpush1.msra.mxu0 0.0
    %718 = vmatprep.subr.mxu0 0.0
    %719 = vmatpush1.msra.mxu0 0.0
    %720 = vmatprep.subr.mxu0 0.0
    %721 = vmatpush1.msra.mxu0 0.0
    %722 = vmatprep.subr.mxu0 0.0
    %723 = vmatpush1.msra.mxu0 0.0
    %724 = vmatprep.subr.mxu0 0.0
    %725 = vmatpush1.msra.mxu0 0.0
    %726 = vmatprep.subr.mxu0 0.0
    %727 = vmatpush1.msra.mxu0 0.0
    %728 = vmatprep.subr.mxu0 0.0
    %729 = vmatpush1.msra.mxu0 0.0
    %730 = vmatprep.subr.mxu0 0.0
    %731 = vmatpush1.msra.mxu0 0.0
    %732 = vmatprep.subr.mxu0 0.0
    %733 = vmatpush1.msra.mxu0 0.0
    %734 = vmatprep.subr.mxu0 0.0
    %735 = vmatpush1.msra.mxu0 0.0
    %736 = vmatprep.subr.mxu0 0.0
    %737 = vmatpush1.msra.mxu0 0.0
    %738 = vmatprep.mubr.f32.mxu0 0.0
    %739 = vmatmul.mubr.f32.gmra.mrb[0].mxu0 %v669
    %v740 = vpop.f32.mrb[0].mxu0
    %v741 = vadd.f32 %v666, %v740
    %v742 = vpop.f32.mrb[0].mxu0
    %743 = vmatprep.mubr.f32.mxu0 0.0
    %744 = vmatmul.mubr.f32.gmra.mrb[0].mxu0 %v672
    %v745 = vpop.f32.mrb[0].mxu0
    %v746 = vadd.f32 %v666, %v745
    %v747 = vpop.f32.mrb[0].mxu0
    %748 = vdwg.mxu0
    %v749 = vadd.f32 %v90, %v741
    %v750 = vadd.f32 %v91, %v746
    %v751 = vld [vmem:[%s18] sm:$0x1]
    %v752 = vld [vmem:[%s19] sm:$0x1]
    %v753 = vsel %vm115, %v749, 0.0
    %754 = vadd.xlane.f32.xlu0 %v753
    %v755 = vpop.xlane.xlu0 %754
    %v756 = vsel %vm115, %v750, 0.0
    %757 = vadd.xlane.f32.xlu0 %v756
    %v758 = vpop.xlane.xlu0 %757
    %v759 = vrcp.pop 32.0
    %v760 = vmul.f32 %v755, %v759
    %v761 = vmul.f32 %v758, %v759
    %v762 = vsub.f32 %v749, %v760
    %v763 = vsub.f32 %v750, %v761
    %v764 = vmul.f32 %v762, %v762
    %v765 = vmul.f32 %v763, %v763
    %v766 = vsel %vm115, %v764, 0.0
    %767 = vadd.xlane.f32.xlu0 %v766
    %v768 = vpop.xlane.xlu0 %767
    %v769 = vsel %vm115, %v765, 0.0
    %770 = vadd.xlane.f32.xlu0 %v769
    %v771 = vpop.xlane.xlu0 %770
    %v772 = vmul.f32 %v768, %v759
    %v773 = vmul.f32 %v771, %v759
    %v774 = vadd.f32 %v772, 1e-05
    %v775 = vadd.f32 %v773, 1e-05
    %v776 = vrsqrt.pop %v774
    %v777 = vrsqrt.pop %v775
    %v778 = vmul.f32 %v762, %v776
    %v779 = vmul.f32 %v763, %v777
    %v781 = vlaneseq
    %v782 = vshrl.u32 %v781, 7
    %v783 = vsub.s32 0, %v782
    %v784 = vrot.slane %v751, %v783
    %v786 = vmul.f32 %v778, %v784
    %v787 = vmul.f32 %v779, %v784
    %v789 = vlaneseq
    %v790 = vshrl.u32 %v789, 7
    %v791 = vsub.s32 0, %v790
    %v792 = vrot.slane %v752, %v791
    %v794 = vadd.f32 %v786, %v792
    %v795 = vadd.f32 %v787, %v792
    %v796 = vadd.f32 %v794, %v96
    %v797 = vadd.f32 %v795, %v97
    %v798 = vld [vmem:[%s10] sm:$0xff]
    %v799 = vld [vmem:[%s10 + $0x8] sm:$0xff]
    %v800 = vld [vmem:[%s10 + $0x10] sm:$0xff]
    %v801 = vld [vmem:[%s10 + $0x18] sm:$0xff]
    %v802 = vld [vmem:[%s11] sm:$0x1]
    %v804 = vlaneseq
    %v805 = vshrl.u32 %v804, 7
    %v806 = vsub.s32 0, %v805
    %v807 = vrot.slane %v802, %v806
    %v810 = vsel %vm115, %v796, 0
    %v813 = vsel %vm115, %v797, 0
    %815 = vmatprep.subr.mxu0 0.0
    %816 = vmatpush1.msra.mxu0 %v798
    %817 = vmatprep.subr.mxu0 0.0
    %818 = vmatpush1.msra.mxu0 %v799
    %819 = vmatprep.subr.mxu0 0.0
    %820 = vmatpush1.msra.mxu0 %v800
    %821 = vmatprep.subr.mxu0 0.0
    %822 = vmatpush1.msra.mxu0 %v801
    %823 = vmatprep.subr.mxu0 0.0
    %824 = vmatpush1.msra.mxu0 0.0
    %825 = vmatprep.subr.mxu0 0.0
    %826 = vmatpush1.msra.mxu0 0.0
    %827 = vmatprep.subr.mxu0 0.0
    %828 = vmatpush1.msra.mxu0 0.0
    %829 = vmatprep.subr.mxu0 0.0
    %830 = vmatpush1.msra.mxu0 0.0
    %831 = vmatprep.subr.mxu0 0.0
    %832 = vmatpush1.msra.mxu0 0.0
    %833 = vmatprep.subr.mxu0 0.0
    %834 = vmatpush1.msra.mxu0 0.0
    %835 = vmatprep.subr.mxu0 0.0
    %836 = vmatpush1.msra.mxu0 0.0
    %837 = vmatprep.subr.mxu0 0.0
    %838 = vmatpush1.msra.mxu0 0.0
    %839 = vmatprep.subr.mxu0 0.0
    %840 = vmatpush1.msra.mxu0 0.0
    %841 = vmatprep.subr.mxu0 0.0
    %842 = vmatpush1.msra.mxu0 0.0
    %843 = vmatprep.subr.mxu0 0.0
    %844 = vmatpush1.msra.mxu0 0.0
    %845 = vmatprep.subr.mxu0 0.0
    %846 = vmatpush1.msra.mxu0 0.0
    %847 = vmatprep.subr.mxu0 0.0
    %848 = vmatpush1.msra.mxu0 0.0
    %849 = vmatprep.subr.mxu0 0.0
    %850 = vmatpush1.msra.mxu0 0.0
    %851 = vmatprep.subr.mxu0 0.0
    %852 = vmatpush1.msra.mxu0 0.0
    %853 = vmatprep.subr.mxu0 0.0
    %854 = vmatpush1.msra.mxu0 0.0
    %855 = vmatprep.subr.mxu0 0.0
    %856 = vmatpush1.msra.mxu0 0.0
    %857 = vmatprep.subr.mxu0 0.0
    %858 = vmatpush1.msra.mxu0 0.0
    %859 = vmatprep.subr.mxu0 0.0
    %860 = vmatpush1.msra.mxu0 0.0
    %861 = vmatprep.subr.mxu0 0.0
    %862 = vmatpush1.msra.mxu0 0.0
    %863 = vmatprep.subr.mxu0 0.0
    %864 = vmatpush1.msra.mxu0 0.0
    %865 = vmatprep.subr.mxu0 0.0
    %866 = vmatpush1.msra.mxu0 0.0
    %867 = vmatprep.subr.mxu0 0.0
    %868 = vmatpush1.msra.mxu0 0.0
    %869 = vmatprep.subr.mxu0 0.0
    %870 = vmatpush1.msra.mxu0 0.0
    %871 = vmatprep.subr.mxu0 0.0
    %872 = vmatpush1.msra.mxu0 0.0
    %873 = vmatprep.subr.mxu0 0.0
    %874 = vmatpush1.msra.mxu0 0.0
    %875 = vmatprep.subr.mxu0 0.0
    %876 = vmatpush1.msra.mxu0 0.0
    %877 = vmatprep.subr.mxu0 0.0
    %878 = vmatpush1.msra.mxu0 0.0
    %879 = vmatprep.mubr.f32.mxu0 0.0
    %880 = vmatmul.mubr.f32.gmra.mrb[0].mxu0 %v810
    %v881 = vpop.f32.mrb[0].mxu0
    %v882 = vadd.f32 %v807, %v881
    %v883 = vpop.f32.mrb[0].mxu0
    %884 = vmatprep.mubr.f32.mxu0 0.0
    %885 = vmatmul.mubr.f32.gmra.mrb[0].mxu0 %v813
    %v886 = vpop.f32.mrb[0].mxu0
    %v887 = vadd.f32 %v807, %v886
    %v888 = vpop.f32.mrb[0].mxu0
    %889 = vdwg.mxu0
    %v890 = vadd.f32 %v92, %v98
    %v891 = vadd.f32 %v93, %v99
    %v892 = vadd.f32 %v94, %v100
    %v893 = vadd.f32 %v95, %v101
    %v894 = vld [vmem:[%s12] sm:$0xff]
    %v895 = vld [vmem:[%s12 + $0x8] sm:$0xff]
    %v896 = vld [vmem:[%s12 + $0x10] sm:$0xff]
    %v897 = vld [vmem:[%s12 + $0x18] sm:$0xff]
    %v898 = vld [vmem:[%s13] sm:$0x1]
    %v900 = vlaneseq
    %v901 = vshrl.u32 %v900, 7
    %v902 = vsub.s32 0, %v901
    %v903 = vrot.slane %v898, %v902
    %v906 = vsel %vm115, %v890, 0
    %v909 = vsel %vm115, %v891, 0
    %v912 = vsel %vm115, %v892, 0
    %v915 = vsel %vm115, %v893, 0
    %917 = vmatprep.subr.mxu0 0.0
    %918 = vmatpush1.msra.mxu0 %v894
    %919 = vmatprep.subr.mxu0 0.0
    %920 = vmatpush1.msra.mxu0 %v895
    %921 = vmatprep.subr.mxu0 0.0
    %922 = vmatpush1.msra.mxu0 %v896
    %923 = vmatprep.subr.mxu0 0.0
    %924 = vmatpush1.msra.mxu0 %v897
    %925 = vmatprep.subr.mxu0 0.0
    %926 = vmatpush1.msra.mxu0 0.0
    %927 = vmatprep.subr.mxu0 0.0
    %928 = vmatpush1.msra.mxu0 0.0
    %929 = vmatprep.subr.mxu0 0.0
    %930 = vmatpush1.msra.mxu0 0.0
    %931 = vmatprep.subr.mxu0 0.0
    %932 = vmatpush1.msra.mxu0 0.0
    %933 = vmatprep.subr.mxu0 0.0
    %934 = vmatpush1.msra.mxu0 0.0
    %935 = vmatprep.subr.mxu0 0.0
    %936 = vmatpush1.msra.mxu0 0.0
    %937 = vmatprep.subr.mxu0 0.0
    %938 = vmatpush1.msra.mxu0 0.0
    %939 = vmatprep.subr.mxu0 0.0
    %940 = vmatpush1.msra.mxu0 0.0
    %941 = vmatprep.subr.mxu0 0.0
    %942 = vmatpush1.msra.mxu0 0.0
    %943 = vmatprep.subr.mxu0 0.0
    %944 = vmatpush1.msra.mxu0 0.0
    %945 = vmatprep.subr.mxu0 0.0
    %946 = vmatpush1.msra.mxu0 0.0
    %947 = vmatprep.subr.mxu0 0.0
    %948 = vmatpush1.msra.mxu0 0.0
    %949 = vmatprep.subr.mxu0 0.0
    %950 = vmatpush1.msra.mxu0 0.0
    %951 = vmatprep.subr.mxu0 0.0
    %952 = vmatpush1.msra.mxu0 0.0
    %953 = vmatprep.subr.mxu0 0.0
    %954 = vmatpush1.msra.mxu0 0.0
    %955 = vmatprep.subr.mxu0 0.0
    %956 = vmatpush1.msra.mxu0 0.0
    %957 = vmatprep.subr.mxu0 0.0
    %958 = vmatpush1.msra.mxu0 0.0
    %959 = vmatprep.subr.mxu0 0.0
    %960 = vmatpush1.msra.mxu0 0.0
    %961 = vmatprep.subr.mxu0 0.0
    %962 = vmatpush1.msra.mxu0 0.0
    %963 = vmatprep.subr.mxu0 0.0
    %964 = vmatpush1.msra.mxu0 0.0
    %965 = vmatprep.subr.mxu0 0.0
    %966 = vmatpush1.msra.mxu0 0.0
    %967 = vmatprep.subr.mxu0 0.0
    %968 = vmatpush1.msra.mxu0 0.0
    %969 = vmatprep.subr.mxu0 0.0
    %970 = vmatpush1.msra.mxu0 0.0
    %971 = vmatprep.subr.mxu0 0.0
    %972 = vmatpush1.msra.mxu0 0.0
    %973 = vmatprep.subr.mxu0 0.0
    %974 = vmatpush1.msra.mxu0 0.0
    %975 = vmatprep.subr.mxu0 0.0
    %976 = vmatpush1.msra.mxu0 0.0
    %977 = vmatprep.subr.mxu0 0.0
    %978 = vmatpush1.msra.mxu0 0.0
    %979 = vmatprep.subr.mxu0 0.0
    %980 = vmatpush1.msra.mxu0 0.0
    %981 = vmatprep.mubr.f32.mxu0 0.0
    %982 = vmatmul.mubr.f32.gmra.mrb[0].mxu0 %v906
    %v983 = vpop.f32.mrb[0].mxu0
    %v984 = vadd.f32 %v903, %v983
    %v985 = vpop.f32.mrb[0].mxu0
    %986 = vmatprep.mubr.f32.mxu0 0.0
    %987 = vmatmul.mubr.f32.gmra.mrb[0].mxu0 %v909
    %v988 = vpop.f32.mrb[0].mxu0
    %v989 = vadd.f32 %v903, %v988
    %v990 = vpop.f32.mrb[0].mxu0
    %991 = vmatprep.mubr.f32.mxu0 0.0
    %992 = vmatmul.mubr.f32.gmra.mrb[0].mxu0 %v912
    %v993 = vpop.f32.mrb[0].mxu0
    %v994 = vadd.f32 %v903, %v993
    %v995 = vpop.f32.mrb[0].mxu0
    %996 = vmatprep.mubr.f32.mxu0 0.0
    %997 = vmatmul.mubr.f32.gmra.mrb[0].mxu0 %v915
    %v998 = vpop.f32.mrb[0].mxu0
    %v999 = vadd.f32 %v903, %v998
    %v1000 = vpop.f32.mrb[0].mxu0
    %1001 = vdwg.mxu0
    %v1002 = vld [vmem:[%s14] sm:$0xff]
    %v1003 = vld [vmem:[%s14 + $0x8] sm:$0xff]
    %v1004 = vld [vmem:[%s14 + $0x10] sm:$0xff]
    %v1005 = vld [vmem:[%s14 + $0x18] sm:$0xff]
    %v1006 = vld [vmem:[%s15] sm:$0x1]
    %v1008 = vlaneseq
    %v1009 = vshrl.u32 %v1008, 7
    %v1010 = vsub.s32 0, %v1009
    %v1011 = vrot.slane %v1006, %v1010
    %v1014 = vsel %vm115, %v92, 0
    %v1017 = vsel %vm115, %v93, 0
    %v1020 = vsel %vm115, %v94, 0
    %v1023 = vsel %vm115, %v95, 0
    %1025 = vmatprep.subr.mxu0 0.0
    %1026 = vmatpush1.msra.mxu0 %v1002
    %1027 = vmatprep.subr.mxu0 0.0
    %1028 = vmatpush1.msra.mxu0 %v1003
    %1029 = vmatprep.subr.mxu0 0.0
    %1030 = vmatpush1.msra.mxu0 %v1004
    %1031 = vmatprep.subr.mxu0 0.0
    %1032 = vmatpush1.msra.mxu0 %v1005
    %1033 = vmatprep.subr.mxu0 0.0
    %1034 = vmatpush1.msra.mxu0 0.0
    %1035 = vmatprep.subr.mxu0 0.0
    %1036 = vmatpush1.msra.mxu0 0.0
    %1037 = vmatprep.subr.mxu0 0.0
    %1038 = vmatpush1.msra.mxu0 0.0
    %1039 = vmatprep.subr.mxu0 0.0
    %1040 = vmatpush1.msra.mxu0 0.0
    %1041 = vmatprep.subr.mxu0 0.0
    %1042 = vmatpush1.msra.mxu0 0.0
    %1043 = vmatprep.subr.mxu0 0.0
    %1044 = vmatpush1.msra.mxu0 0.0
    %1045 = vmatprep.subr.mxu0 0.0
    %1046 = vmatpush1.msra.mxu0 0.0
    %1047 = vmatprep.subr.mxu0 0.0
    %1048 = vmatpush1.msra.mxu0 0.0
    %1049 = vmatprep.subr.mxu0 0.0
    %1050 = vmatpush1.msra.mxu0 0.0
    %1051 = vmatprep.subr.mxu0 0.0
    %1052 = vmatpush1.msra.mxu0 0.0
    %1053 = vmatprep.subr.mxu0 0.0
    %1054 = vmatpush1.msra.mxu0 0.0
    %1055 = vmatprep.subr.mxu0 0.0
    %1056 = vmatpush1.msra.mxu0 0.0
    %1057 = vmatprep.subr.mxu0 0.0
    %1058 = vmatpush1.msra.mxu0 0.0
    %1059 = vmatprep.subr.mxu0 0.0
    %1060 = vmatpush1.msra.mxu0 0.0
    %1061 = vmatprep.subr.mxu0 0.0
    %1062 = vmatpush1.msra.mxu0 0.0
    %1063 = vmatprep.subr.mxu0 0.0
    %1064 = vmatpush1.msra.mxu0 0.0
    %1065 = vmatprep.subr.mxu0 0.0
    %1066 = vmatpush1.msra.mxu0 0.0
    %1067 = vmatprep.subr.mxu0 0.0
    %1068 = vmatpush1.msra.mxu0 0.0
    %1069 = vmatprep.subr.mxu0 0.0
    %1070 = vmatpush1.msra.mxu0 0.0
    %1071 = vmatprep.subr.mxu0 0.0
    %1072 = vmatpush1.msra.mxu0 0.0
    %1073 = vmatprep.subr.mxu0 0.0
    %1074 = vmatpush1.msra.mxu0 0.0
    %1075 = vmatprep.subr.mxu0 0.0
    %1076 = vmatpush1.msra.mxu0 0.0
    %1077 = vmatprep.subr.mxu0 0.0
    %1078 = vmatpush1.msra.mxu0 0.0
    %1079 = vmatprep.subr.mxu0 0.0
    %1080 = vmatpush1.msra.mxu0 0.0
    %1081 = vmatprep.subr.mxu0 0.0
    %1082 = vmatpush1.msra.mxu0 0.0
    %1083 = vmatprep.subr.mxu0 0.0
    %1084 = vmatpush1.msra.mxu0 0.0
    %1085 = vmatprep.subr.mxu0 0.0
    %1086 = vmatpush1.msra.mxu0 0.0
    %1087 = vmatprep.subr.mxu0 0.0
    %1088 = vmatpush1.msra.mxu0 0.0
    %1089 = vmatprep.mubr.f32.mxu0 0.0
    %1090 = vmatmul.mubr.f32.gmra.mrb[0].mxu0 %v1014
    %v1091 = vpop.f32.mrb[0].mxu0
    %v1092 = vadd.f32 %v1011, %v1091
    %v1093 = vpop.f32.mrb[0].mxu0
    %1094 = vmatprep.mubr.f32.mxu0 0.0
    %1095 = vmatmul.mubr.f32.gmra.mrb[0].mxu0 %v1017
    %v1096 = vpop.f32.mrb[0].mxu0
    %v1097 = vadd.f32 %v1011, %v1096
    %v1098 = vpop.f32.mrb[0].mxu0
    %1099 = vmatprep.mubr.f32.mxu0 0.0
    %1100 = vmatmul.mubr.f32.gmra.mrb[0].mxu0 %v1020
    %v1101 = vpop.f32.mrb[0].mxu0
    %v1102 = vadd.f32 %v1011, %v1101
    %v1103 = vpop.f32.mrb[0].mxu0
    %1104 = vmatprep.mubr.f32.mxu0 0.0
    %1105 = vmatmul.mubr.f32.gmra.mrb[0].mxu0 %v1023
    %v1106 = vpop.f32.mrb[0].mxu0
    %v1107 = vadd.f32 %v1011, %v1106
    %v1108 = vpop.f32.mrb[0].mxu0
    %1109 = vdwg.mxu0
    %v1110 = vld [vmem:[%s16] sm:$0xff]
    %v1111 = vld [vmem:[%s16 + $0x8] sm:$0xff]
    %v1112 = vld [vmem:[%s16 + $0x10] sm:$0xff]
    %v1113 = vld [vmem:[%s16 + $0x18] sm:$0xff]
    %v1114 = vld [vmem:[%s17] sm:$0x1]
    %v1115 = vld [vmem:[%s25] sm:$0xff]
    %v1116 = vld [vmem:[%s25 + $0x8] sm:$0xff]
    %v1117 = vld [vmem:[%s25 + $0x10] sm:$0xff]
    %v1118 = vld [vmem:[%s25 + $0x18] sm:$0xff]
    %v1119 = vld [vmem:[%s25 + $0x20] sm:$0xff]
    %v1120 = vld [vmem:[%s25 + $0x28] sm:$0xff]
    %v1121 = vld [vmem:[%s25 + $0x30] sm:$0xff]
    %v1122 = vld [vmem:[%s25 + $0x38] sm:$0xff]
    %v1123 = vld [vmem:[%s25 + $0x40] sm:$0xff]
    %v1124 = vld [vmem:[%s25 + $0x48] sm:$0xff]
    %v1125 = vld [vmem:[%s25 + $0x50] sm:$0xff]
    %v1126 = vld [vmem:[%s25 + $0x58] sm:$0xff]
    %v1127 = vld [vmem:[%s25 + $0x60] sm:$0xff]
    %v1128 = vld [vmem:[%s25 + $0x68] sm:$0xff]
    %v1129 = vld [vmem:[%s25 + $0x70] sm:$0xff]
    %v1130 = vld [vmem:[%s25 + $0x78] sm:$0xff]
    %v1131 = vld [vmem:[%s26] sm:$0xff]
    %v1132 = vld [vmem:[%s26 + $0x8] sm:$0xff]
    %v1133 = vld [vmem:[%s26 + $0x10] sm:$0xff]
    %v1134 = vld [vmem:[%s26 + $0x18] sm:$0xff]
    %v1135 = vld [vmem:[%s26 + $0x20] sm:$0xff]
    %v1136 = vld [vmem:[%s26 + $0x28] sm:$0xff]
    %v1137 = vld [vmem:[%s26 + $0x30] sm:$0xff]
    %v1138 = vld [vmem:[%s26 + $0x38] sm:$0xff]
    %v1139 = vld [vmem:[%s26 + $0x40] sm:$0xff]
    %v1140 = vld [vmem:[%s26 + $0x48] sm:$0xff]
    %v1141 = vld [vmem:[%s26 + $0x50] sm:$0xff]
    %v1142 = vld [vmem:[%s26 + $0x58] sm:$0xff]
    %v1143 = vld [vmem:[%s26 + $0x60] sm:$0xff]
    %v1144 = vld [vmem:[%s26 + $0x68] sm:$0xff]
    %v1145 = vld [vmem:[%s26 + $0x70] sm:$0xff]
    %v1146 = vld [vmem:[%s26 + $0x78] sm:$0xff]
    %v1147 = vld [vmem:[%s27] sm:$0xff]
    %v1148 = vld [vmem:[%s27 + $0x8] sm:$0xff]
    %v1149 = vmul.f32 %v984, %v1115
    %v1150 = vmul.f32 %v989, %v1116
    %v1151 = vmul.f32 %v994, %v1117
    %v1152 = vmul.f32 %v999, %v1118
    %v1153 = vmul.f32 %v984, %v1119
    %v1154 = vmul.f32 %v989, %v1120
    %v1155 = vmul.f32 %v994, %v1121
    %v1156 = vmul.f32 %v999, %v1122
    %v1157 = vmul.f32 %v984, %v1123
    %v1158 = vmul.f32 %v989, %v1124
    %v1159 = vmul.f32 %v994, %v1125
    %v1160 = vmul.f32 %v999, %v1126
    %v1161 = vmul.f32 %v984, %v1127
    %v1162 = vmul.f32 %v989, %v1128
    %v1163 = vmul.f32 %v994, %v1129
    %v1164 = vmul.f32 %v999, %v1130
    %v1165 = vmul.f32 %v1092, %v1115
    %v1166 = vmul.f32 %v1097, %v1116
    %v1167 = vmul.f32 %v1102, %v1117
    %v1168 = vmul.f32 %v1107, %v1118
    %v1169 = vmul.f32 %v1092, %v1119
    %v1170 = vmul.f32 %v1097, %v1120
    %v1171 = vmul.f32 %v1102, %v1121
    %v1172 = vmul.f32 %v1107, %v1122
    %v1173 = vmul.f32 %v1092, %v1123
    %v1174 = vmul.f32 %v1097, %v1124
    %v1175 = vmul.f32 %v1102, %v1125
    %v1176 = vmul.f32 %v1107, %v1126
    %v1177 = vmul.f32 %v1092, %v1127
    %v1178 = vmul.f32 %v1097, %v1128
    %v1179 = vmul.f32 %v1102, %v1129
    %v1180 = vmul.f32 %v1107, %v1130
    %v1182 = vsel %vm115, %v882, 0
    %v1185 = vsel %vm115, %v887, 0
    %v1188 = vsel %vm115, %v1149, 0
    %v1191 = vsel %vm115, %v1150, 0
    %v1194 = vsel %vm115, %v1151, 0
    %v1197 = vsel %vm115, %v1152, 0
    %v1200 = vsel %vm115, %v1153, 0
    %v1203 = vsel %vm115, %v1154, 0
    %v1206 = vsel %vm115, %v1155, 0
    %v1209 = vsel %vm115, %v1156, 0
    %v1212 = vsel %vm115, %v1157, 0
    %v1215 = vsel %vm115, %v1158, 0
    %v1218 = vsel %vm115, %v1159, 0
    %v1221 = vsel %vm115, %v1160, 0
    %v1224 = vsel %vm115, %v1161, 0
    %v1227 = vsel %vm115, %v1162, 0
    %v1230 = vsel %vm115, %v1163, 0
    %v1233 = vsel %vm115, %v1164, 0
    %1235 = vmatprep.subr.mxu0 0.0
    %1236 = vmatpush1.xpose.msra.mxu0 %v1188
    %1237 = vmatprep.subr.mxu0 0.0
    %1238 = vmatpush1.xpose.msra.mxu0 %v1191
    %1239 = vmatprep.subr.mxu0 0.0
    %1240 = vmatpush1.xpose.msra.mxu0 %v1194
    %1241 = vmatprep.subr.mxu0 0.0
    %1242 = vmatpush1.xpose.msra.mxu0 %v1197
    %1243 = vmatprep.subr.mxu0 0.0
    %1244 = vmatpush1.xpose.msra.mxu0 %v1200
    %1245 = vmatprep.subr.mxu0 0.0
    %1246 = vmatpush1.xpose.msra.mxu0 %v1203
    %1247 = vmatprep.subr.mxu0 0.0
    %1248 = vmatpush1.xpose.msra.mxu0 %v1206
    %1249 = vmatprep.subr.mxu0 0.0
    %1250 = vmatpush1.xpose.msra.mxu0 %v1209
    %1251 = vmatprep.subr.mxu0 0.0
    %1252 = vmatpush1.xpose.msra.mxu0 %v1212
    %1253 = vmatprep.subr.mxu0 0.0
    %1254 = vmatpush1.xpose.msra.mxu0 %v1215
    %1255 = vmatprep.subr.mxu0 0.0
    %1256 = vmatpush1.xpose.msra.mxu0 %v1218
    %1257 = vmatprep.subr.mxu0 0.0
    %1258 = vmatpush1.xpose.msra.mxu0 %v1221
    %1259 = vmatprep.subr.mxu0 0.0
    %1260 = vmatpush1.xpose.msra.mxu0 %v1224
    %1261 = vmatprep.subr.mxu0 0.0
    %1262 = vmatpush1.xpose.msra.mxu0 %v1227
    %1263 = vmatprep.subr.mxu0 0.0
    %1264 = vmatpush1.xpose.msra.mxu0 %v1230
    %1265 = vmatprep.subr.mxu0 0.0
    %1266 = vmatpush1.xpose.msra.mxu0 %v1233
    %1267 = vmatprep.subr.mxu0 0.0
    %1268 = vmatpush1.xpose.msra.mxu0 0.0
    %1269 = vmatprep.subr.mxu0 0.0
    %1270 = vmatpush1.xpose.msra.mxu0 0.0
    %1271 = vmatprep.subr.mxu0 0.0
    %1272 = vmatpush1.xpose.msra.mxu0 0.0
    %1273 = vmatprep.subr.mxu0 0.0
    %1274 = vmatpush1.xpose.msra.mxu0 0.0
    %1275 = vmatprep.subr.mxu0 0.0
    %1276 = vmatpush1.xpose.msra.mxu0 0.0
    %1277 = vmatprep.subr.mxu0 0.0
    %1278 = vmatpush1.xpose.msra.mxu0 0.0
    %1279 = vmatprep.subr.mxu0 0.0
    %1280 = vmatpush1.xpose.msra.mxu0 0.0
    %1281 = vmatprep.subr.mxu0 0.0
    %1282 = vmatpush1.xpose.msra.mxu0 0.0
    %1283 = vmatprep.subr.mxu0 0.0
    %1284 = vmatpush1.xpose.msra.mxu0 0.0
    %1285 = vmatprep.subr.mxu0 0.0
    %1286 = vmatpush1.xpose.msra.mxu0 0.0
    %1287 = vmatprep.subr.mxu0 0.0
    %1288 = vmatpush1.xpose.msra.mxu0 0.0
    %1289 = vmatprep.subr.mxu0 0.0
    %1290 = vmatpush1.xpose.msra.mxu0 0.0
    %1291 = vmatprep.subr.mxu0 0.0
    %1292 = vmatpush1.xpose.msra.mxu0 0.0
    %1293 = vmatprep.subr.mxu0 0.0
    %1294 = vmatpush1.xpose.msra.mxu0 0.0
    %1295 = vmatprep.subr.mxu0 0.0
    %1296 = vmatpush1.xpose.msra.mxu0 0.0
    %1297 = vmatprep.subr.mxu0 0.0
    %1298 = vmatpush1.xpose.msra.mxu0 0.0
    %1299 = vmatprep.mubr.f32.mxu0 0.0
    %1300 = vmatmul.mubr.f32.gmra.mrb[0].mxu0 %v1182
    %v1301 = vpop.f32.mrb[0].mxu0
    %v1302 = vadd.f32 %v1147, %v1301
    %v1303 = vpop.f32.mrb[0].mxu0
    %1304 = vmatprep.mubr.f32.mxu0 0.0
    %1305 = vmatmul.mubr.f32.gmra.mrb[0].mxu0 %v1185
    %v1306 = vpop.f32.mrb[0].mxu0
    %v1307 = vadd.f32 %v1148, %v1306
    %v1308 = vpop.f32.mrb[0].mxu0
    %1309 = vdwg.mxu0
    %1310 = vmax.xlane.f32.xlu0 %v1302
    %v1311 = vpop.xlane.xlu0 %1310
    %1312 = vmax.xlane.f32.xlu0 %v1307
    %v1313 = vpop.xlane.xlu0 %1312
    %v1314 = vsub.f32 %v1302, %v1311
    %v1315 = vsub.f32 %v1307, %v1313
    %v1316 = vmul.f32 %v1314, 1.442695
    %v1317 = vpow.pop %v1316
    %v1318 = vmul.f32 %v1315, 1.442695
    %v1319 = vpow.pop %v1318
    %1320 = vmatprep.subr.mxu0 0.0
    %1321 = vmatpush1.msra.mxu0 %v1131
    %1322 = vmatprep.subr.mxu0 0.0
    %1323 = vmatpush1.msra.mxu0 %v1132
    %1324 = vmatprep.subr.mxu0 0.0
    %1325 = vmatpush1.msra.mxu0 %v1133
    %1326 = vmatprep.subr.mxu0 0.0
    %1327 = vmatpush1.msra.mxu0 %v1134
    %1328 = vmatprep.subr.mxu0 0.0
    %1329 = vmatpush1.msra.mxu0 %v1135
    %1330 = vmatprep.subr.mxu0 0.0
    %1331 = vmatpush1.msra.mxu0 %v1136
    %1332 = vmatprep.subr.mxu0 0.0
    %1333 = vmatpush1.msra.mxu0 %v1137
    %1334 = vmatprep.subr.mxu0 0.0
    %1335 = vmatpush1.msra.mxu0 %v1138
    %1336 = vmatprep.subr.mxu0 0.0
    %1337 = vmatpush1.msra.mxu0 %v1139
    %1338 = vmatprep.subr.mxu0 0.0
    %1339 = vmatpush1.msra.mxu0 %v1140
    %1340 = vmatprep.subr.mxu0 0.0
    %1341 = vmatpush1.msra.mxu0 %v1141
    %1342 = vmatprep.subr.mxu0 0.0
    %1343 = vmatpush1.msra.mxu0 %v1142
    %1344 = vmatprep.subr.mxu0 0.0
    %1345 = vmatpush1.msra.mxu0 %v1143
    %1346 = vmatprep.subr.mxu0 0.0
    %1347 = vmatpush1.msra.mxu0 %v1144
    %1348 = vmatprep.subr.mxu0 0.0
    %1349 = vmatpush1.msra.mxu0 %v1145
    %1350 = vmatprep.subr.mxu0 0.0
    %1351 = vmatpush1.msra.mxu0 %v1146
    %1352 = vmatprep.subr.mxu0 0.0
    %1353 = vmatpush1.msra.mxu0 0.0
    %1354 = vmatprep.subr.mxu0 0.0
    %1355 = vmatpush1.msra.mxu0 0.0
    %1356 = vmatprep.subr.mxu0 0.0
    %1357 = vmatpush1.msra.mxu0 0.0
    %1358 = vmatprep.subr.mxu0 0.0
    %1359 = vmatpush1.msra.mxu0 0.0
    %1360 = vmatprep.subr.mxu0 0.0
    %1361 = vmatpush1.msra.mxu0 0.0
    %1362 = vmatprep.subr.mxu0 0.0
    %1363 = vmatpush1.msra.mxu0 0.0
    %1364 = vmatprep.subr.mxu0 0.0
    %1365 = vmatpush1.msra.mxu0 0.0
    %1366 = vmatprep.subr.mxu0 0.0
    %1367 = vmatpush1.msra.mxu0 0.0
    %1368 = vmatprep.subr.mxu0 0.0
    %1369 = vmatpush1.msra.mxu0 0.0
    %1370 = vmatprep.subr.mxu0 0.0
    %1371 = vmatpush1.msra.mxu0 0.0
    %1372 = vmatprep.subr.mxu0 0.0
    %1373 = vmatpush1.msra.mxu0 0.0
    %1374 = vmatprep.subr.mxu0 0.0
    %1375 = vmatpush1.msra.mxu0 0.0
    %1376 = vmatprep.subr.mxu0 0.0
    %1377 = vmatpush1.msra.mxu0 0.0
    %1378 = vmatprep.subr.mxu0 0.0
    %1379 = vmatpush1.msra.mxu0 0.0
    %1380 = vmatprep.subr.mxu0 0.0
    %1381 = vmatpush1.msra.mxu0 0.0
    %1382 = vmatprep.subr.mxu0 0.0
    %1383 = vmatpush1.msra.mxu0 0.0
    %1384 = vmatprep.mubr.f32.mxu0 0.0
    %1385 = vmatmul.mubr.f32.gmra.mrb[0].mxu0 %v1317
    %v1386 = vpop.f32.mrb[0].mxu0
    %v1387 = vadd.f32 0.0, %v1386
    %v1388 = vpop.f32.mrb[0].mxu0
    %1389 = vmatprep.mubr.f32.mxu0 0.0
    %1390 = vmatmul.mubr.f32.gmra.mrb[0].mxu0 %v1319
    %v1391 = vpop.f32.mrb[0].mxu0
    %v1392 = vadd.f32 0.0, %v1391
    %v1393 = vpop.f32.mrb[0].mxu0
    %1394 = vdwg.mxu0
    %v1395 = vmax.f32 %v1387, 1e-20
    %v1396 = vmax.f32 %v1392, 1e-20
    %v1397 = vrcp.pop %v1395
    %v1398 = vrcp.pop %v1396
    %v1399 = vmul.f32 %v1317, %v1397
    %v1400 = vmul.f32 %v1319, %v1398
    %1401 = vmatprep.subr.mxu0 0.0
    %1402 = vmatpush1.msra.mxu0 %v1165
    %1403 = vmatprep.subr.mxu0 0.0
    %1404 = vmatpush1.msra.mxu0 %v1166
    %1405 = vmatprep.subr.mxu0 0.0
    %1406 = vmatpush1.msra.mxu0 %v1167
    %1407 = vmatprep.subr.mxu0 0.0
    %1408 = vmatpush1.msra.mxu0 %v1168
    %1409 = vmatprep.subr.mxu0 0.0
    %1410 = vmatpush1.msra.mxu0 %v1169
    %1411 = vmatprep.subr.mxu0 0.0
    %1412 = vmatpush1.msra.mxu0 %v1170
    %1413 = vmatprep.subr.mxu0 0.0
    %1414 = vmatpush1.msra.mxu0 %v1171
    %1415 = vmatprep.subr.mxu0 0.0
    %1416 = vmatpush1.msra.mxu0 %v1172
    %1417 = vmatprep.subr.mxu0 0.0
    %1418 = vmatpush1.msra.mxu0 %v1173
    %1419 = vmatprep.subr.mxu0 0.0
    %1420 = vmatpush1.msra.mxu0 %v1174
    %1421 = vmatprep.subr.mxu0 0.0
    %1422 = vmatpush1.msra.mxu0 %v1175
    %1423 = vmatprep.subr.mxu0 0.0
    %1424 = vmatpush1.msra.mxu0 %v1176
    %1425 = vmatprep.subr.mxu0 0.0
    %1426 = vmatpush1.msra.mxu0 %v1177
    %1427 = vmatprep.subr.mxu0 0.0
    %1428 = vmatpush1.msra.mxu0 %v1178
    %1429 = vmatprep.subr.mxu0 0.0
    %1430 = vmatpush1.msra.mxu0 %v1179
    %1431 = vmatprep.subr.mxu0 0.0
    %1432 = vmatpush1.msra.mxu0 %v1180
    %1433 = vmatprep.subr.mxu0 0.0
    %1434 = vmatpush1.msra.mxu0 0.0
    %1435 = vmatprep.subr.mxu0 0.0
    %1436 = vmatpush1.msra.mxu0 0.0
    %1437 = vmatprep.subr.mxu0 0.0
    %1438 = vmatpush1.msra.mxu0 0.0
    %1439 = vmatprep.subr.mxu0 0.0
    %1440 = vmatpush1.msra.mxu0 0.0
    %1441 = vmatprep.subr.mxu0 0.0
    %1442 = vmatpush1.msra.mxu0 0.0
    %1443 = vmatprep.subr.mxu0 0.0
    %1444 = vmatpush1.msra.mxu0 0.0
    %1445 = vmatprep.subr.mxu0 0.0
    %1446 = vmatpush1.msra.mxu0 0.0
    %1447 = vmatprep.subr.mxu0 0.0
    %1448 = vmatpush1.msra.mxu0 0.0
    %1449 = vmatprep.subr.mxu0 0.0
    %1450 = vmatpush1.msra.mxu0 0.0
    %1451 = vmatprep.subr.mxu0 0.0
    %1452 = vmatpush1.msra.mxu0 0.0
    %1453 = vmatprep.subr.mxu0 0.0
    %1454 = vmatpush1.msra.mxu0 0.0
    %1455 = vmatprep.subr.mxu0 0.0
    %1456 = vmatpush1.msra.mxu0 0.0
    %1457 = vmatprep.subr.mxu0 0.0
    %1458 = vmatpush1.msra.mxu0 0.0
    %1459 = vmatprep.subr.mxu0 0.0
    %1460 = vmatpush1.msra.mxu0 0.0
    %1461 = vmatprep.subr.mxu0 0.0
    %1462 = vmatpush1.msra.mxu0 0.0
    %1463 = vmatprep.subr.mxu0 0.0
    %1464 = vmatpush1.msra.mxu0 0.0
    %1465 = vmatprep.mubr.f32.mxu0 0.0
    %1466 = vmatmul.mubr.f32.gmra.mrb[0].mxu0 %v1399
    %v1467 = vpop.f32.mrb[0].mxu0
    %v1468 = vadd.f32 0.0, %v1467
    %v1469 = vpop.f32.mrb[0].mxu0
    %1470 = vmatprep.mubr.f32.mxu0 0.0
    %1471 = vmatmul.mubr.f32.gmra.mrb[0].mxu0 %v1400
    %v1472 = vpop.f32.mrb[0].mxu0
    %v1473 = vadd.f32 0.0, %v1472
    %v1474 = vpop.f32.mrb[0].mxu0
    %1475 = vdwg.mxu0
    %v1477 = vlaneseq
    %v1478 = vshrl.u32 %v1477, 7
    %v1479 = vsub.s32 0, %v1478
    %v1480 = vrot.slane %v1114, %v1479
    %v1483 = vsel %vm115, %v1468, 0
    %v1486 = vsel %vm115, %v1473, 0
    %1488 = vmatprep.subr.mxu0 0.0
    %1489 = vmatpush1.msra.mxu0 %v1110
    %1490 = vmatprep.subr.mxu0 0.0
    %1491 = vmatpush1.msra.mxu0 %v1111
    %1492 = vmatprep.subr.mxu0 0.0
    %1493 = vmatpush1.msra.mxu0 %v1112
    %1494 = vmatprep.subr.mxu0 0.0
    %1495 = vmatpush1.msra.mxu0 %v1113
    %1496 = vmatprep.subr.mxu0 0.0
    %1497 = vmatpush1.msra.mxu0 0.0
    %1498 = vmatprep.subr.mxu0 0.0
    %1499 = vmatpush1.msra.mxu0 0.0
    %1500 = vmatprep.subr.mxu0 0.0
    %1501 = vmatpush1.msra.mxu0 0.0
    %1502 = vmatprep.subr.mxu0 0.0
    %1503 = vmatpush1.msra.mxu0 0.0
    %1504 = vmatprep.subr.mxu0 0.0
    %1505 = vmatpush1.msra.mxu0 0.0
    %1506 = vmatprep.subr.mxu0 0.0
    %1507 = vmatpush1.msra.mxu0 0.0
    %1508 = vmatprep.subr.mxu0 0.0
    %1509 = vmatpush1.msra.mxu0 0.0
    %1510 = vmatprep.subr.mxu0 0.0
    %1511 = vmatpush1.msra.mxu0 0.0
    %1512 = vmatprep.subr.mxu0 0.0
    %1513 = vmatpush1.msra.mxu0 0.0
    %1514 = vmatprep.subr.mxu0 0.0
    %1515 = vmatpush1.msra.mxu0 0.0
    %1516 = vmatprep.subr.mxu0 0.0
    %1517 = vmatpush1.msra.mxu0 0.0
    %1518 = vmatprep.subr.mxu0 0.0
    %1519 = vmatpush1.msra.mxu0 0.0
    %1520 = vmatprep.subr.mxu0 0.0
    %1521 = vmatpush1.msra.mxu0 0.0
    %1522 = vmatprep.subr.mxu0 0.0
    %1523 = vmatpush1.msra.mxu0 0.0
    %1524 = vmatprep.subr.mxu0 0.0
    %1525 = vmatpush1.msra.mxu0 0.0
    %1526 = vmatprep.subr.mxu0 0.0
    %1527 = vmatpush1.msra.mxu0 0.0
    %1528 = vmatprep.subr.mxu0 0.0
    %1529 = vmatpush1.msra.mxu0 0.0
    %1530 = vmatprep.subr.mxu0 0.0
    %1531 = vmatpush1.msra.mxu0 0.0
    %1532 = vmatprep.subr.mxu0 0.0
    %1533 = vmatpush1.msra.mxu0 0.0
    %1534 = vmatprep.subr.mxu0 0.0
    %1535 = vmatpush1.msra.mxu0 0.0
    %1536 = vmatprep.subr.mxu0 0.0
    %1537 = vmatpush1.msra.mxu0 0.0
    %1538 = vmatprep.subr.mxu0 0.0
    %1539 = vmatpush1.msra.mxu0 0.0
    %1540 = vmatprep.subr.mxu0 0.0
    %1541 = vmatpush1.msra.mxu0 0.0
    %1542 = vmatprep.subr.mxu0 0.0
    %1543 = vmatpush1.msra.mxu0 0.0
    %1544 = vmatprep.subr.mxu0 0.0
    %1545 = vmatpush1.msra.mxu0 0.0
    %1546 = vmatprep.subr.mxu0 0.0
    %1547 = vmatpush1.msra.mxu0 0.0
    %1548 = vmatprep.subr.mxu0 0.0
    %1549 = vmatpush1.msra.mxu0 0.0
    %1550 = vmatprep.subr.mxu0 0.0
    %1551 = vmatpush1.msra.mxu0 0.0
    %1552 = vmatprep.mubr.f32.mxu0 0.0
    %1553 = vmatmul.mubr.f32.gmra.mrb[0].mxu0 %v1483
    %v1554 = vpop.f32.mrb[0].mxu0
    %v1555 = vadd.f32 %v1480, %v1554
    %v1556 = vpop.f32.mrb[0].mxu0
    %1557 = vmatprep.mubr.f32.mxu0 0.0
    %1558 = vmatmul.mubr.f32.gmra.mrb[0].mxu0 %v1486
    %v1559 = vpop.f32.mrb[0].mxu0
    %v1560 = vadd.f32 %v1480, %v1559
    %v1561 = vpop.f32.mrb[0].mxu0
    %1562 = vdwg.mxu0
    %v1563 = vadd.f32 %v794, %v1555
    %v1564 = vadd.f32 %v795, %v1560
    %v1565 = vld [vmem:[%s20] sm:$0x1]
    %v1566 = vld [vmem:[%s21] sm:$0x1]
    %v1567 = vsel %vm115, %v1563, 0.0
    %1568 = vadd.xlane.f32.xlu0 %v1567
    %v1569 = vpop.xlane.xlu0 %1568
    %v1570 = vsel %vm115, %v1564, 0.0
    %1571 = vadd.xlane.f32.xlu0 %v1570
    %v1572 = vpop.xlane.xlu0 %1571
    %v1573 = vmul.f32 %v1569, %v759
    %v1574 = vmul.f32 %v1572, %v759
    %v1575 = vsub.f32 %v1563, %v1573
    %v1576 = vsub.f32 %v1564, %v1574
    %v1577 = vmul.f32 %v1575, %v1575
    %v1578 = vmul.f32 %v1576, %v1576
    %v1579 = vsel %vm115, %v1577, 0.0
    %1580 = vadd.xlane.f32.xlu0 %v1579
    %v1581 = vpop.xlane.xlu0 %1580
    %v1582 = vsel %vm115, %v1578, 0.0
    %1583 = vadd.xlane.f32.xlu0 %v1582
    %v1584 = vpop.xlane.xlu0 %1583
    %v1585 = vmul.f32 %v1581, %v759
    %v1586 = vmul.f32 %v1584, %v759
    %v1587 = vadd.f32 %v1585, 1e-05
    %v1588 = vadd.f32 %v1586, 1e-05
    %v1589 = vrsqrt.pop %v1587
    %v1590 = vrsqrt.pop %v1588
    %v1591 = vmul.f32 %v1575, %v1589
    %v1592 = vmul.f32 %v1576, %v1590
    %v1594 = vlaneseq
    %v1595 = vshrl.u32 %v1594, 7
    %v1596 = vsub.s32 0, %v1595
    %v1597 = vrot.slane %v1565, %v1596
    %v1599 = vmul.f32 %v1591, %v1597
    %v1600 = vmul.f32 %v1592, %v1597
    %v1602 = vlaneseq
    %v1603 = vshrl.u32 %v1602, 7
    %v1604 = vsub.s32 0, %v1603
    %v1605 = vrot.slane %v1566, %v1604
    %v1607 = vadd.f32 %v1599, %v1605
    %v1608 = vadd.f32 %v1600, %v1605
    %1609 = vst.msk [vmem:[#allocation2] sm:$0xff] %vm115, %v1607
    %1610 = vst.msk [vmem:[#allocation2 + $0x8] sm:$0xff] %vm115, %v1608
    // Predicated region
    $region114: #{transformer_decoder_layer_thin.1} parent=1 // pred_check
      _
    $region115: #{transformer_decoder_layer_thin.1} parent=1 // pred_check_branch
      %1612 = sbr.rel (0) target = $region117
    $region116: #{transformer_decoder_layer_thin.1} parent=1 // pred_region
      %s1614 = ssub.s32 256, 256
      %1615 = vsyncadd [#allocation3], %s1614
      %s1616 = sshll.u32 [#allocation2], 4
      %s1617 = int_to_ptr.vmem [resolvable:$true] %s1616
      %1622 = dma.vmem_to_hbm [thread:$0]  %s1617, 256, %s28, [#allocation3], 128, 128, 8
    $region117: #{transformer_decoder_layer_thin.1} parent=1 // pred_fallthru
      _
    // Predicated region
    $region118: #{transformer_decoder_layer_thin.1} parent=1 // pred_check
      _
    $region119: #{transformer_decoder_layer_thin.1} parent=1 // pred_check_branch
      %1624 = sbr.rel (0) target = $region121
    $region120: #{transformer_decoder_layer_thin.1} parent=1 // pred_region
      %1625 = dma.done [#allocation3], 256
    $region121: #{transformer_decoder_layer_thin.1} parent=1 // pred_fallthru
      _
    %1626 = vsyncpa [#allocation3], 1

</llo_original>
